<compile_context>
chip_gen: v5e
topology: v5e:2x2
jax: 0.10.0
libtpu: 0.0.40
codegen_flags: <defaults>
</compile_context>

<pallas_src>
import functools

import jax
import jax.numpy as jnp
from jax.experimental import pallas as pl
from jax.experimental.pallas import tpu as pltpu


def _se_mul_conv1x1_kernel(gate_ref, w_ref, x_ref, o_ref):
    # gate_ref: [1,  Cin]   raw SE gate logits for this batch sample (resident)
    # w_ref:    [Cout,Cin]  1x1 conv weight (resident)
    # x_ref:    [Cin, TM]   activation tile (spatial positions in the lane dim)
    # o_ref:    [Cout,TM]
    gate = jax.nn.sigmoid(gate_ref[...].astype(jnp.float32))            # [1, Cin]
    wg = (w_ref[...].astype(jnp.float32) * gate).astype(x_ref.dtype)    # [Cout, Cin]
    o_ref[...] = jnp.dot(
        wg, x_ref[...], preferred_element_type=jnp.float32,
    ).astype(o_ref.dtype)


@functools.partial(jax.jit, static_argnames=("tm",))
def se_mul_conv1x1(gate_nchw, x_nchw, weight_oihw, *, tm=1024):
    """sigmoid(gate) * x followed by a 1x1 conv (no bias). NCHW in / NCHW out."""
    n, cin, h, w = x_nchw.shape
    cout = weight_oihw.shape[0]
    hw = h * w

    # Pure reshapes only — no transposes, no pad copies.
    x3d = x_nchw.reshape(n, cin, hw)        # [N, Cin, M]
    gate3d = gate_nchw.reshape(n, 1, cin)   # [N, 1, Cin]
    w2d = weight_oihw.reshape(cout, cin)    # [Cout, Cin]

    # Lane tile along M: multiple of 128; prefer >=2 tiles on the parallel M
    # axis (v7x has 2 TensorCores and, with N=1, M is the only parallel axis).
    tm = max(128, ((tm + 127) // 128) * 128)
    if hw > tm:
        tm_eff = tm
    elif hw > 256:
        tm_eff = (((hw + 1) // 2 + 127) // 128) * 128   # split into 2 lane tiles
    else:
        tm_eff = hw                                      # single full-extent tile
    num_m_tiles = pl.cdiv(hw, tm_eff)
    grid = (n, num_m_tiles)

    dbytes = jnp.dtype(x_nchw.dtype).itemsize
    cost = pl.CostEstimate(
        flops=2 * n * hw * cin * cout,
        transcendentals=n * num_m_tiles * cin,   # sigmoid fold recomputed per tile
        bytes_accessed=(n * hw * (cin + cout) + cout * cin + n * cin) * dbytes,
    )

    out3d = pl.pallas_call(
        _se_mul_conv1x1_kernel,
        out_shape=jax.ShapeDtypeStruct((n, cout, hw), x_nchw.dtype),
        grid_spec=pltpu.PrefetchScalarGridSpec(
            num_scalar_prefetch=0,
            grid=grid,
            in_specs=[
                pl.BlockSpec((None, 1, cin), lambda b, i: (b, 0, 0)),       # gate
                pl.BlockSpec((cout, cin), lambda b, i: (0, 0)),             # weight
                pl.BlockSpec((None, cin, tm_eff), lambda b, i: (b, 0, i)),  # x
            ],
            out_specs=pl.BlockSpec((None, cout, tm_eff), lambda b, i: (b, 0, i)),
        ),
        compiler_params=pltpu.CompilerParams(
            # Both axes parallel: N across samples, M across TensorCores (v7x).
            dimension_semantics=("parallel", "parallel"),
            # VMEM footprint at tm=1024 f32 is ~2 MiB double-buffered — far
            # below every generation's scoped default; no explicit limit needed.
        ),
        cost_estimate=cost,
    )(gate3d, w2d, x3d)

    return out3d.reshape(n, cout, h, w)


if __name__ == "__main__":
    # Channel dims fixed by Conv2d(192, 48); spatial 56x56 matches the module
    # (hw = 3136 -> tm = 1024 -> grid (1, 4), last tile 64-lane ragged/masked).
    key = jax.random.PRNGKey(0)
    k1, k2, k3 = jax.random.split(key, 3)

    N, CIN, COUT, H, W = 1, 192, 48, 56, 56
    x60 = jax.random.normal(k1, (N, CIN, H, W), dtype=jnp.float32)   # activations
    x64 = jax.random.normal(k2, (N, CIN, 1, 1), dtype=jnp.float32)   # SE gate logits
    wgt = jax.random.normal(k3, (COUT, CIN, 1, 1), dtype=jnp.float32) * (1.0 / jnp.sqrt(CIN))

    out = se_mul_conv1x1(x64, x60, wgt)
    out = jax.block_until_ready(out)

    # Reference in plain JAX (same math, full-precision matmul).
    gated = x60 * jax.nn.sigmoid(x64)
    ref = jnp.einsum("nchw,oc->nohw", gated, wgt.reshape(COUT, CIN),
                     precision=jax.lax.Precision.HIGHEST)
    assert out.shape == (N, COUT, H, W)
    assert jnp.allclose(out, ref, atol=1e-3, rtol=1e-3), float(jnp.max(jnp.abs(out - ref)))

    print("KERNEL_OK")
</pallas_src>

<mosaic_0001>
module attributes {stable_mosaic.version = 11 : i64} {
  func.func @_se_mul_conv1x1_kernel(%arg0: i32, %arg1: i32, %arg2: memref<1x1x192xf32, #tpu.memory_space<vmem>>, %arg3: memref<48x192xf32, #tpu.memory_space<vmem>>, %arg4: memref<1x192x1024xf32, #tpu.memory_space<vmem>>, %arg5: memref<1x48x1024xf32, #tpu.memory_space<vmem>>) attributes {dimension_semantics = [#tpu.dimension_semantics<parallel>, #tpu.dimension_semantics<parallel>], iteration_bounds = array<i64: 1, 4>, scalar_prefetch = 0 : i64, scratch_operands = 0 : i64, tpu.core_type = #tpu.core_type<tc>, window_params = [{transform_indices = @transform_0, window_bounds = array<i64: 1, 1, 192>}, {pipeline_mode = #tpu.pipeline_mode<synchronous>, transform_indices = @transform_1, window_bounds = array<i64: 48, 192>}, {transform_indices = @transform_2, window_bounds = array<i64: 1, 192, 1024>}, {transform_indices = @transform_3, window_bounds = array<i64: 1, 48, 1024>}]} {
    %c0 = arith.constant 0 : index
    %c0_0 = arith.constant 0 : index
    %c0_1 = arith.constant 0 : index
    %0 = vector.load %arg2[%c0, %c0_0, %c0_1] : memref<1x1x192xf32, #tpu.memory_space<vmem>>, vector<1x1x192xf32>
    %1 = vector.shape_cast %0 : vector<1x1x192xf32> to vector<1x192xf32>
    %2 = arith.negf %1 : vector<1x192xf32>
    %3 = math.exp %2 : vector<1x192xf32>
    %cst = arith.constant 1.000000e+00 : f32
    %4 = vector.broadcast %cst : f32 to vector<1x192xf32>
    %5 = arith.addf %4, %3 : vector<1x192xf32>
    %6 = arith.divf %4, %5 : vector<1x192xf32>
    %c0_2 = arith.constant 0 : index
    %c0_3 = arith.constant 0 : index
    %7 = vector.load %arg3[%c0_2, %c0_3] : memref<48x192xf32, #tpu.memory_space<vmem>>, vector<48x192xf32>
    %8 = vector.broadcast %6 : vector<1x192xf32> to vector<48x192xf32>
    %9 = arith.mulf %7, %8 : vector<48x192xf32>
    %c0_4 = arith.constant 0 : index
    %c0_5 = arith.constant 0 : index
    %c0_6 = arith.constant 0 : index
    %10 = vector.load %arg4[%c0_4, %c0_5, %c0_6] : memref<1x192x1024xf32, #tpu.memory_space<vmem>>, vector<1x192x1024xf32>
    %11 = vector.shape_cast %10 : vector<1x192x1024xf32> to vector<192x1024xf32>
    %cst_7 = arith.constant dense<0.000000e+00> : vector<48x1024xf32>
    %12 = tpu.matmul %9, %11, %cst_7 {dimension_numbers = #tpu.dot_dimension_numbers<[1], [0], [0], [1], [0, 0, 1, 1], [], []>} : vector<48x192xf32>, vector<192x1024xf32>, vector<48x1024xf32> -> vector<48x1024xf32>
    %c0_8 = arith.constant 0 : index
    %c0_9 = arith.constant 0 : index
    %c0_10 = arith.constant 0 : index
    %13 = vector.load %arg5[%c0_8, %c0_9, %c0_10] : memref<1x48x1024xf32, #tpu.memory_space<vmem>>, vector<1x48x1024xf32>
    %14 = vector.shape_cast %13 : vector<1x48x1024xf32> to vector<48x1024xf32>
    %15 = vector.shape_cast %12 : vector<48x1024xf32> to vector<1x48x1024xf32>
    tpu.vector_store %arg5[%c0_8, %c0_9, %c0_10], %15 {strides = array<i32>} : memref<1x48x1024xf32, #tpu.memory_space<vmem>>, vector<1x48x1024xf32>,
    return
  }
  func.func @transform_0(%arg0: i32, %arg1: i32) -> (i32, i32, i32) {
    %c0_i32 = arith.constant 0 : i32
    %c0_i32_0 = arith.constant 0 : i32
    %c0_i32_1 = arith.constant 0 : i32
    return %arg0, %c0_i32, %c0_i32_0 : i32, i32, i32
  }
  func.func @transform_1(%arg0: i32, %arg1: i32) -> (i32, i32) {
    %c0_i32 = arith.constant 0 : i32
    %c0_i32_0 = arith.constant 0 : i32
    %c0_i32_1 = arith.constant 0 : i32
    return %c0_i32, %c0_i32_0 : i32, i32
  }
  func.func @transform_2(%arg0: i32, %arg1: i32) -> (i32, i32, i32) {
    %c0_i32 = arith.constant 0 : i32
    %c0_i32_0 = arith.constant 0 : i32
    return %arg0, %c0_i32, %arg1 : i32, i32, i32
  }
  func.func @transform_3(%arg0: i32, %arg1: i32) -> (i32, i32, i32) {
    %c0_i32 = arith.constant 0 : i32
    %c0_i32_0 = arith.constant 0 : i32
    return %arg0, %c0_i32, %arg1 : i32, i32, i32
  }
}

</mosaic_0001>

<llo_original>
// kernel: se_mul_conv1x1.1
$region0: #{se_mul_conv1x1.1}
  #allocation0 [shape = 'u32[]', space=smem, size = 0x4, offset = 0x4, fixed_abs, tag = 'smem constant byte address 0x4 - core index']
  #allocation1 [shape = 'u32[72,128]{1,0:T(1,128)}', space=vmem, size = 0x9000, scoped, tag = 'internal scratch']
  %s0 = inlined_call_operand.vmem [shape: f32[1,1,192], index: 0, kind: input, shape index: {}]
  %s1 = inlined_call_operand.vmem [shape: f32[48,192], index: 1, kind: input, shape index: {}]
  %s2 = inlined_call_operand.vmem [shape: f32[1,192,3136], index: 2, kind: input, shape index: {}]
  %s3 = inlined_call_operand.vmem [shape: f32[1,48,3136], index: 3, kind: output, shape index: {}]
  %s4 = sld [smem:[#allocation0]]
  $region173: #{se_mul_conv1x1.1} parent=0
    _
  %s6 = ssub.s32 1, %s4
  %s7 = scalar_select 0, %s6, %s4
  $region1: #{se_mul_conv1x1.1} parent=0
    #allocation2 [shape = 'u8[1572864]{0}', space=vmem, size = 0x180000, scoped, tag = 'input window, operand 2']
    #allocation3 [shape = 'u8[393216]{0}', space=vmem, size = 0x60000, scoped, tag = 'output window, operand 0']
    loop: start=0, step=1, limit=6
    $region2: #{se_mul_conv1x1.1} parent=1 // loop_pre_header
      _
    $region3: #{se_mul_conv1x1.1} parent=1 // loop_header
      %s9 = sphi 0, %s13
      %p10 = scmp.ge.s32.totalorder %s9, 6
      %s16 = sphi 0, %s28
      %s17 = sphi 0, %s24
      %s18 = sphi 0, %s16
      %s19 = sphi 0, %s17
      %s20 = sphi 0, %s18
      %s21 = sphi 0, %s19
      %s31 = sphi 0, %s33
      %s34 = sphi 0, %s31
      %s35 = sphi 0, %s34
      %s51 = sphi 0, %s35
      %s55 = sphi 0, %s55
      %s57 = sphi 0, %s55
      %s58 = sphi 0, %s57
      %s72 = sphi 0, %s58
      %s80 = sphi 0, %s82
      %s83 = sphi 0, %s80
      %s84 = sphi 0, %s83
      %s100 = sphi 0, %s84
      %s108 = sphi 0, %s110
      %s111 = sphi 0, %s108
      %s112 = sphi 0, %s111
      %s128 = sphi 0, %s112
    $region4: #{se_mul_conv1x1.1} parent=1 // loop_header_branch
      %12 = sbr.rel (%p10) target = $region8
    $region5: #{se_mul_conv1x1.1} parent=1 // loop_body
      %s14 = ssub.s32 %s9, 1
      %s15 = ssub.s32 %s9, 2
      %s22 = sadd.s32 1, %s17
      %p23 = scmp.ge.s32.totalorder %s22, 4
      %s24 = scalar_select %p23, 0, %s22
      %s25 = sadd.s32 1, %s16
      %s26 = scalar_select %p23, %s25, %s16
      %p27 = scmp.ge.s32.totalorder %s26, 1
      %s28 = scalar_select %p27, 0, %s26
      %s29 = ssub.s32 %s16, %s28
      %p30 = scmp.eq.s32.totalorder %s29, 0
      %s32 = sadd.s32 %s31, 1
      %s33 = scalar_select %p30, %s31, %s32
      %p36 = pneg %p30
      %p37 = scmp.eq.s32.totalorder %s9, 3
      %p38 = por %p36, %p37
      %p39 = scmp.ne.s32.totalorder %s31, %s34
      %p40 = scmp.eq.s32.totalorder %s9, 0
      %p41 = por %p39, %p40
      %p42 = scmp.ne.s32.totalorder %s31, %s34
      %p43 = scmp.eq.s32.totalorder %s14, 3
      %p44 = por %p42, %p43
      %p45 = scmp.ne.s32.totalorder %s34, %s35
      %p46 = scmp.eq.s32.totalorder %s14, 0
      %p47 = por %p45, %p46
      %p48 = scmp.ne.s32.totalorder %s34, %s35
      %p49 = scmp.eq.s32.totalorder %s15, 3
      %p50 = por %p48, %p49
      %p52 = scmp.ne.s32.totalorder %s35, %s51
      %p53 = scmp.eq.s32.totalorder %s15, 0
      %p54 = por %p52, %p53
      %s56 = sadd.s32 %s55, 1
      %p59 = scmp.eq.s32.totalorder %s9, 3
      %p60 = scmp.ne.s32.totalorder %s55, %s57
      %p61 = scmp.eq.s32.totalorder %s9, 0
      %p62 = por %p60, %p61
      %p63 = scmp.ne.s32.totalorder %s55, %s57
      %p64 = scmp.eq.s32.totalorder %s14, 3
      %p65 = por %p63, %p64
      %p66 = scmp.ne.s32.totalorder %s57, %s58
      %p67 = scmp.eq.s32.totalorder %s14, 0
      %p68 = por %p66, %p67
      %p69 = scmp.ne.s32.totalorder %s57, %s58
      %p70 = scmp.eq.s32.totalorder %s15, 3
      %p71 = por %p69, %p70
      %p73 = scmp.ne.s32.totalorder %s58, %s72
      %p74 = scmp.eq.s32.totalorder %s15, 0
      %p75 = por %p73, %p74
      %s76 = ssub.s32 %s16, %s28
      %s77 = ssub.s32 %s17, %s24
      %s78 = sor.u32 %s76, %s77
      %p79 = scmp.eq.s32.totalorder %s78, 0
      %s81 = sadd.s32 %s80, 1
      %s82 = scalar_select %p79, %s80, %s81
      %p85 = pneg %p79
      %p86 = scmp.eq.s32.totalorder %s9, 3
      %p87 = por %p85, %p86
      %p88 = scmp.ne.s32.totalorder %s80, %s83
      %p89 = scmp.eq.s32.totalorder %s9, 0
      %p90 = por %p88, %p89
      %p91 = scmp.ne.s32.totalorder %s80, %s83
      %p92 = scmp.eq.s32.totalorder %s14, 3
      %p93 = por %p91, %p92
      %p94 = scmp.ne.s32.totalorder %s83, %s84
      %p95 = scmp.eq.s32.totalorder %s14, 0
      %p96 = por %p94, %p95
      %p97 = scmp.ne.s32.totalorder %s83, %s84
      %p98 = scmp.eq.s32.totalorder %s15, 3
      %p99 = por %p97, %p98
      %p101 = scmp.ne.s32.totalorder %s84, %s100
      %p102 = scmp.eq.s32.totalorder %s15, 0
      %p103 = por %p101, %p102
      %s104 = ssub.s32 %s16, %s28
      %s105 = ssub.s32 %s17, %s24
      %s106 = sor.u32 %s104, %s105
      %p107 = scmp.eq.s32.totalorder %s106, 0
      %s109 = sadd.s32 %s108, 1
      %s110 = scalar_select %p107, %s108, %s109
      %p113 = pneg %p107
      %p114 = scmp.eq.s32.totalorder %s9, 3
      %p115 = por %p113, %p114
      %p116 = scmp.ne.s32.totalorder %s108, %s111
      %p117 = scmp.eq.s32.totalorder %s9, 0
      %p118 = por %p116, %p117
      %p119 = scmp.ne.s32.totalorder %s108, %s111
      %p120 = scmp.eq.s32.totalorder %s14, 3
      %p121 = por %p119, %p120
      %p122 = scmp.ne.s32.totalorder %s111, %s112
      %p123 = scmp.eq.s32.totalorder %s14, 0
      %p124 = por %p122, %p123
      %p125 = scmp.ne.s32.totalorder %s111, %s112
      %p126 = scmp.eq.s32.totalorder %s15, 3
      %p127 = por %p125, %p126
      %p129 = scmp.ne.s32.totalorder %s112, %s128
      %p130 = scmp.eq.s32.totalorder %s15, 0
      %p131 = por %p129, %p130
      %p132 = scmp.le.s32.totalorder 1, %s9
      %p133 = scmp.lt.s32.totalorder %s9, 5
      %p134 = pnand %p132, %p133
      %p135 = pneg %p134
      // Predicated region
      $region9: #{se_mul_conv1x1.1} parent=5 // pred_check
        _
      $region10: #{se_mul_conv1x1.1} parent=5 // pred_check_branch
        %137 = sbr.rel (%p134) target = $region12
      $region11: #{se_mul_conv1x1.1} parent=5 // pred_region
        %s138 = ssub.s32 %s9, 1
        // Predicated region
        $region13: #{se_mul_conv1x1.1} parent=11 // pred_check
          %p139 = pneg %p47
        $region14: #{se_mul_conv1x1.1} parent=11 // pred_check_branch
          %141 = sbr.rel (%p139) target = $region16
        $region15: #{se_mul_conv1x1.1} parent=11 // pred_region
          %p142 = scmp.lt.s32.totalorder %s18, 0
          %s143 = scalar_select %p142, %s18, 0
          %s144 = smul.addr %s143, 2
          %s145 = scalar_lea.vmem %s0, %s144
        $region16: #{se_mul_conv1x1.1} parent=11 // pred_fallthru
          _
        // Predicated region
        $region17: #{se_mul_conv1x1.1} parent=11 // pred_check
          %p146 = pneg %p68
        $region18: #{se_mul_conv1x1.1} parent=11 // pred_check_branch
          %148 = sbr.rel (%p146) target = $region20
        $region19: #{se_mul_conv1x1.1} parent=11 // pred_region
          _
        $region20: #{se_mul_conv1x1.1} parent=11 // pred_fallthru
          _
      $region12: #{se_mul_conv1x1.1} parent=5 // pred_fallthru
        _
      %p149 = scmp.lt.s32.totalorder %s9, 4
      // Predicated region
      $region21: #{se_mul_conv1x1.1} parent=5 // pred_check
        %p150 = pneg %p149
      $region22: #{se_mul_conv1x1.1} parent=5 // pred_check_branch
        %152 = sbr.rel (%p150) target = $region24
      $region23: #{se_mul_conv1x1.1} parent=5 // pred_region
        // Predicated region
        $region25: #{se_mul_conv1x1.1} parent=23 // pred_check
          %p153 = pneg %p90
        $region26: #{se_mul_conv1x1.1} parent=23 // pred_check_branch
          %155 = sbr.rel (%p153) target = $region28
        $region27: #{se_mul_conv1x1.1} parent=23 // pred_region
          %s156 = sand.u32 %s80, 1
          %s157 = sand.u32 %s80, 1
          %s158 = smul.addr %s157, 1536
          %s159 = scalar_lea.vmem [#allocation2], %s158
          %s160 = smul.u32 8, %s17
          %s161 = ssub.s32 25, %s160
          %p162 = scmp.lt.s32.totalorder %s161, 8
          %s163 = scalar_select %p162, %s161, 8
          %s164 = smul.u32 192, %s163
          %p165 = scmp.ne.s32.totalorder 0, %s164
          %s166 = smul.addr %s16, 600
          %s167 = sadd.s32 %s160, %s166
          %s168 = smul.addr %s167, 8
          %s169 = scalar_lea.vmem %s2, %s168
          %s170 = smul.u32 %s163, 8
          // Predicated region
          $region29: #{se_mul_conv1x1.1} parent=27 // pred_check
            %p171 = pneg %p165
          $region30: #{se_mul_conv1x1.1} parent=27 // pred_check_branch
            %173 = sbr.rel (%p171) target = $region32
          $region31: #{se_mul_conv1x1.1} parent=27 // pred_region
            %p174 = scmp.lt.u32.totalorder %s170, 8
            %p175 = pneg %p174
            // Predicated region
            $region33: #{se_mul_conv1x1.1} parent=31 // pred_check
              _
            $region34: #{se_mul_conv1x1.1} parent=31 // pred_check_branch
              %177 = sbr.rel (%p174) target = $region36
            $region35: #{se_mul_conv1x1.1} parent=31 // pred_region
              %s239 = sand.u32 %s170, 7
              %p240 = scmp.eq.s32.totalorder %s239, 0
              // Predicated region
              $region48: #{se_mul_conv1x1.1} parent=35 // pred_check
                %p241 = pneg %p240
              $region49: #{se_mul_conv1x1.1} parent=35 // pred_check_branch
                %243 = sbr.rel (%p241) target = $region51
              $region50: #{se_mul_conv1x1.1} parent=35 // pred_region
                %s244 = sshrl.u32 %s170, 3
                %s245 = sshrl.u32 %s244, 1
                // While loop
                $region52: #{se_mul_conv1x1.1} parent=50 // loop_pre_header
                  _
                $region53: #{se_mul_conv1x1.1} parent=50 // loop_header
                  %s247 = sphi 0, %s249
                  %p248 = scmp.ge.s32.totalorder %s247, %s245
                  %s252 = sphi 0, %s353
                  %s253 = sphi %s169, %s356
                  %s254 = sphi %s159, %s357
                $region54: #{se_mul_conv1x1.1} parent=50 // loop_header_branch
                  %251 = sbr.rel (%p248) target = $region58
                $region55: #{se_mul_conv1x1.1} parent=50 // loop_body
                  %v255 = vld [vmem:[%s253] sm:$0xff]
                  %256 = vst [vmem:[%s254] sm:$0xff] %v255
                  %v257 = vld [vmem:[%s253 + $0x8] sm:$0xff]
                  %258 = vst [vmem:[%s254 + $0x8] sm:$0xff] %v257
                  %v259 = vld [vmem:[%s253 + $0xc8] sm:$0xff]
                  %260 = vst [vmem:[%s254 + $0x40] sm:$0xff] %v259
                  %v261 = vld [vmem:[%s253 + $0xd0] sm:$0xff]
                  %262 = vst [vmem:[%s254 + $0x48] sm:$0xff] %v261
                  %v263 = vld [vmem:[%s253 + $0x190] sm:$0xff]
                  %264 = vst [vmem:[%s254 + $0x80] sm:$0xff] %v263
                  %v265 = vld [vmem:[%s253 + $0x198] sm:$0xff]
                  %266 = vst [vmem:[%s254 + $0x88] sm:$0xff] %v265
                  %v267 = vld [vmem:[%s253 + $0x258] sm:$0xff]
                  %268 = vst [vmem:[%s254 + $0xc0] sm:$0xff] %v267
                  %v269 = vld [vmem:[%s253 + $0x260] sm:$0xff]
                  %270 = vst [vmem:[%s254 + $0xc8] sm:$0xff] %v269
                  %v271 = vld [vmem:[%s253 + $0x320] sm:$0xff]
                  %272 = vst [vmem:[%s254 + $0x100] sm:$0xff] %v271
                  %v273 = vld [vmem:[%s253 + $0x328] sm:$0xff]
                  %274 = vst [vmem:[%s254 + $0x108] sm:$0xff] %v273
                  %v275 = vld [vmem:[%s253 + $0x3e8] sm:$0xff]
                  %276 = vst [vmem:[%s254 + $0x140] sm:$0xff] %v275
                  %v277 = vld [vmem:[%s253 + $0x3f0] sm:$0xff]
                  %278 = vst [vmem:[%s254 + $0x148] sm:$0xff] %v277
                  %v279 = vld [vmem:[%s253 + $0x4b0] sm:$0xff]
                  %280 = vst [vmem:[%s254 + $0x180] sm:$0xff] %v279
                  %v281 = vld [vmem:[%s253 + $0x4b8] sm:$0xff]
                  %282 = vst [vmem:[%s254 + $0x188] sm:$0xff] %v281
                  %v283 = vld [vmem:[%s253 + $0x578] sm:$0xff]
                  %284 = vst [vmem:[%s254 + $0x1c0] sm:$0xff] %v283
                  %v285 = vld [vmem:[%s253 + $0x580] sm:$0xff]
                  %286 = vst [vmem:[%s254 + $0x1c8] sm:$0xff] %v285
                  %v287 = vld [vmem:[%s253 + $0x640] sm:$0xff]
                  %288 = vst [vmem:[%s254 + $0x200] sm:$0xff] %v287
                  %v289 = vld [vmem:[%s253 + $0x648] sm:$0xff]
                  %290 = vst [vmem:[%s254 + $0x208] sm:$0xff] %v289
                  %v291 = vld [vmem:[%s253 + $0x708] sm:$0xff]
                  %292 = vst [vmem:[%s254 + $0x240] sm:$0xff] %v291
                  %v293 = vld [vmem:[%s253 + $0x710] sm:$0xff]
                  %294 = vst [vmem:[%s254 + $0x248] sm:$0xff] %v293
                  %v295 = vld [vmem:[%s253 + $0x7d0] sm:$0xff]
                  %296 = vst [vmem:[%s254 + $0x280] sm:$0xff] %v295
                  %v297 = vld [vmem:[%s253 + $0x7d8] sm:$0xff]
                  %298 = vst [vmem:[%s254 + $0x288] sm:$0xff] %v297
                  %v299 = vld [vmem:[%s253 + $0x898] sm:$0xff]
                  %300 = vst [vmem:[%s254 + $0x2c0] sm:$0xff] %v299
                  %v301 = vld [vmem:[%s253 + $0x8a0] sm:$0xff]
                  %302 = vst [vmem:[%s254 + $0x2c8] sm:$0xff] %v301
                  %v303 = vld [vmem:[%s253 + $0x960] sm:$0xff]
                  %304 = vst [vmem:[%s254 + $0x300] sm:$0xff] %v303
                  %v305 = vld [vmem:[%s253 + $0x968] sm:$0xff]
                  %306 = vst [vmem:[%s254 + $0x308] sm:$0xff] %v305
                  %v307 = vld [vmem:[%s253 + $0xa28] sm:$0xff]
                  %308 = vst [vmem:[%s254 + $0x340] sm:$0xff] %v307
                  %v309 = vld [vmem:[%s253 + $0xa30] sm:$0xff]
                  %310 = vst [vmem:[%s254 + $0x348] sm:$0xff] %v309
                  %v311 = vld [vmem:[%s253 + $0xaf0] sm:$0xff]
                  %312 = vst [vmem:[%s254 + $0x380] sm:$0xff] %v311
                  %v313 = vld [vmem:[%s253 + $0xaf8] sm:$0xff]
                  %314 = vst [vmem:[%s254 + $0x388] sm:$0xff] %v313
                  %v315 = vld [vmem:[%s253 + $0xbb8] sm:$0xff]
                  %316 = vst [vmem:[%s254 + $0x3c0] sm:$0xff] %v315
                  %v317 = vld [vmem:[%s253 + $0xbc0] sm:$0xff]
                  %318 = vst [vmem:[%s254 + $0x3c8] sm:$0xff] %v317
                  %v319 = vld [vmem:[%s253 + $0xc80] sm:$0xff]
                  %320 = vst [vmem:[%s254 + $0x400] sm:$0xff] %v319
                  %v321 = vld [vmem:[%s253 + $0xc88] sm:$0xff]
                  %322 = vst [vmem:[%s254 + $0x408] sm:$0xff] %v321
                  %v323 = vld [vmem:[%s253 + $0xd48] sm:$0xff]
                  %324 = vst [vmem:[%s254 + $0x440] sm:$0xff] %v323
                  %v325 = vld [vmem:[%s253 + $0xd50] sm:$0xff]
                  %326 = vst [vmem:[%s254 + $0x448] sm:$0xff] %v325
                  %v327 = vld [vmem:[%s253 + $0xe10] sm:$0xff]
                  %328 = vst [vmem:[%s254 + $0x480] sm:$0xff] %v327
                  %v329 = vld [vmem:[%s253 + $0xe18] sm:$0xff]
                  %330 = vst [vmem:[%s254 + $0x488] sm:$0xff] %v329
                  %v331 = vld [vmem:[%s253 + $0xed8] sm:$0xff]
                  %332 = vst [vmem:[%s254 + $0x4c0] sm:$0xff] %v331
                  %v333 = vld [vmem:[%s253 + $0xee0] sm:$0xff]
                  %334 = vst [vmem:[%s254 + $0x4c8] sm:$0xff] %v333
                  %v335 = vld [vmem:[%s253 + $0xfa0] sm:$0xff]
                  %336 = vst [vmem:[%s254 + $0x500] sm:$0xff] %v335
                  %v337 = vld [vmem:[%s253 + $0xfa8] sm:$0xff]
                  %338 = vst [vmem:[%s254 + $0x508] sm:$0xff] %v337
                  %v339 = vld [vmem:[%s253 + $0x1068] sm:$0xff]
                  %340 = vst [vmem:[%s254 + $0x540] sm:$0xff] %v339
                  %v341 = vld [vmem:[%s253 + $0x1070] sm:$0xff]
                  %342 = vst [vmem:[%s254 + $0x548] sm:$0xff] %v341
                  %v343 = vld [vmem:[%s253 + $0x1130] sm:$0xff]
                  %344 = vst [vmem:[%s254 + $0x580] sm:$0xff] %v343
                  %v345 = vld [vmem:[%s253 + $0x1138] sm:$0xff]
                  %346 = vst [vmem:[%s254 + $0x588] sm:$0xff] %v345
                  %v347 = vld [vmem:[%s253 + $0x11f8] sm:$0xff]
                  %348 = vst [vmem:[%s254 + $0x5c0] sm:$0xff] %v347
                  %v349 = vld [vmem:[%s253 + $0x1200] sm:$0xff]
                  %350 = vst [vmem:[%s254 + $0x5c8] sm:$0xff] %v349
                  %s351 = sadd.s32 1, %s252
                  %p352 = scmp.ge.s32.totalorder %s351, %s245
                  %s353 = scalar_select %p352, 0, %s351
                  %s354 = smul.u32 %s353, 16
                  %s355 = smul.u32 %s353, 16
                  %s356 = scalar_lea.vmem %s169, %s354
                  %s357 = scalar_lea.vmem %s159, %s355 [#allocation2]
                $region56: #{se_mul_conv1x1.1} parent=50 // loop_footer
                  %s249 = sadd.s32 %s247, 1
                $region57: #{se_mul_conv1x1.1} parent=50 // loop_footer_branch
                  %246 = sbr.rel target = $region53
                $region58: #{se_mul_conv1x1.1} parent=50 // loop_exit
                  _
                %s358 = sshrl.u32 %s244, 1
                %s359 = sand.u32 %s244, 1
                %s360 = smul.u32 %s358, 2
                %s361 = smul.u32 8, %s360
                %s362 = scalar_lea.vmem %s169, %s361
                %s363 = smul.u32 8, %s360
                %s364 = scalar_lea.vmem %s159, %s363 [#allocation2]
                // While loop
                $region59: #{se_mul_conv1x1.1} parent=50 // loop_pre_header
                  _
                $region60: #{se_mul_conv1x1.1} parent=50 // loop_header
                  %s366 = sphi 0, %s368
                  %p367 = scmp.ge.s32.totalorder %s366, %s359
                  %s371 = sphi 0, %s424
                  %s372 = sphi %s362, %s427
                  %s373 = sphi %s364, %s428
                $region61: #{se_mul_conv1x1.1} parent=50 // loop_header_branch
                  %370 = sbr.rel (%p367) target = $region65
                $region62: #{se_mul_conv1x1.1} parent=50 // loop_body
                  %v374 = vld [vmem:[%s372] sm:$0xff]
                  %375 = vst [vmem:[%s373] sm:$0xff] %v374
                  %v376 = vld [vmem:[%s372 + $0xc8] sm:$0xff]
                  %377 = vst [vmem:[%s373 + $0x40] sm:$0xff] %v376
                  %v378 = vld [vmem:[%s372 + $0x190] sm:$0xff]
                  %379 = vst [vmem:[%s373 + $0x80] sm:$0xff] %v378
                  %v380 = vld [vmem:[%s372 + $0x258] sm:$0xff]
                  %381 = vst [vmem:[%s373 + $0xc0] sm:$0xff] %v380
                  %v382 = vld [vmem:[%s372 + $0x320] sm:$0xff]
                  %383 = vst [vmem:[%s373 + $0x100] sm:$0xff] %v382
                  %v384 = vld [vmem:[%s372 + $0x3e8] sm:$0xff]
                  %385 = vst [vmem:[%s373 + $0x140] sm:$0xff] %v384
                  %v386 = vld [vmem:[%s372 + $0x4b0] sm:$0xff]
                  %387 = vst [vmem:[%s373 + $0x180] sm:$0xff] %v386
                  %v388 = vld [vmem:[%s372 + $0x578] sm:$0xff]
                  %389 = vst [vmem:[%s373 + $0x1c0] sm:$0xff] %v388
                  %v390 = vld [vmem:[%s372 + $0x640] sm:$0xff]
                  %391 = vst [vmem:[%s373 + $0x200] sm:$0xff] %v390
                  %v392 = vld [vmem:[%s372 + $0x708] sm:$0xff]
                  %393 = vst [vmem:[%s373 + $0x240] sm:$0xff] %v392
                  %v394 = vld [vmem:[%s372 + $0x7d0] sm:$0xff]
                  %395 = vst [vmem:[%s373 + $0x280] sm:$0xff] %v394
                  %v396 = vld [vmem:[%s372 + $0x898] sm:$0xff]
                  %397 = vst [vmem:[%s373 + $0x2c0] sm:$0xff] %v396
                  %v398 = vld [vmem:[%s372 + $0x960] sm:$0xff]
                  %399 = vst [vmem:[%s373 + $0x300] sm:$0xff] %v398
                  %v400 = vld [vmem:[%s372 + $0xa28] sm:$0xff]
                  %401 = vst [vmem:[%s373 + $0x340] sm:$0xff] %v400
                  %v402 = vld [vmem:[%s372 + $0xaf0] sm:$0xff]
                  %403 = vst [vmem:[%s373 + $0x380] sm:$0xff] %v402
                  %v404 = vld [vmem:[%s372 + $0xbb8] sm:$0xff]
                  %405 = vst [vmem:[%s373 + $0x3c0] sm:$0xff] %v404
                  %v406 = vld [vmem:[%s372 + $0xc80] sm:$0xff]
                  %407 = vst [vmem:[%s373 + $0x400] sm:$0xff] %v406
                  %v408 = vld [vmem:[%s372 + $0xd48] sm:$0xff]
                  %409 = vst [vmem:[%s373 + $0x440] sm:$0xff] %v408
                  %v410 = vld [vmem:[%s372 + $0xe10] sm:$0xff]
                  %411 = vst [vmem:[%s373 + $0x480] sm:$0xff] %v410
                  %v412 = vld [vmem:[%s372 + $0xed8] sm:$0xff]
                  %413 = vst [vmem:[%s373 + $0x4c0] sm:$0xff] %v412
                  %v414 = vld [vmem:[%s372 + $0xfa0] sm:$0xff]
                  %415 = vst [vmem:[%s373 + $0x500] sm:$0xff] %v414
                  %v416 = vld [vmem:[%s372 + $0x1068] sm:$0xff]
                  %417 = vst [vmem:[%s373 + $0x540] sm:$0xff] %v416
                  %v418 = vld [vmem:[%s372 + $0x1130] sm:$0xff]
                  %419 = vst [vmem:[%s373 + $0x580] sm:$0xff] %v418
                  %v420 = vld [vmem:[%s372 + $0x11f8] sm:$0xff]
                  %421 = vst [vmem:[%s373 + $0x5c0] sm:$0xff] %v420
                  %s422 = sadd.s32 1, %s371
                  %p423 = scmp.ge.s32.totalorder %s422, %s359
                  %s424 = scalar_select %p423, 0, %s422
                  %s425 = smul.u32 %s424, 8
                  %s426 = smul.u32 %s424, 8
                  %s427 = scalar_lea.vmem %s362, %s425
                  %s428 = scalar_lea.vmem %s364, %s426 [#allocation2]
                $region63: #{se_mul_conv1x1.1} parent=50 // loop_footer
                  %s368 = sadd.s32 %s366, 1
                $region64: #{se_mul_conv1x1.1} parent=50 // loop_footer_branch
                  %365 = sbr.rel target = $region60
                $region65: #{se_mul_conv1x1.1} parent=50 // loop_exit
                  _
              $region51: #{se_mul_conv1x1.1} parent=35 // pred_fallthru
                _
              %p429 = pneg %p240
              // Predicated region
              $region66: #{se_mul_conv1x1.1} parent=35 // pred_check
                _
              $region67: #{se_mul_conv1x1.1} parent=35 // pred_check_branch
                %431 = sbr.rel (%p240) target = $region69
              $region68: #{se_mul_conv1x1.1} parent=35 // pred_region
                %s432 = sand.u32 %s170, 7
                %s433 = ssub.s32 %s170, %s432
                %s434 = scalar_lea.vmem %s169, %s433
                %s435 = ssub.s32 %s170, %s432
                %s436 = scalar_lea.vmem %s159, %s435 [#allocation2]
                %s437 = sshrl.u32 %s170, 3
                %s438 = sshrl.u32 %s437, 1
                // While loop
                $region70: #{se_mul_conv1x1.1} parent=68 // loop_pre_header
                  _
                $region71: #{se_mul_conv1x1.1} parent=68 // loop_header
                  %s440 = sphi 0, %s442
                  %p441 = scmp.ge.s32.totalorder %s440, %s438
                  %s445 = sphi 0, %s546
                  %s446 = sphi %s169, %s549
                  %s447 = sphi %s159, %s550
                $region72: #{se_mul_conv1x1.1} parent=68 // loop_header_branch
                  %444 = sbr.rel (%p441) target = $region76
                $region73: #{se_mul_conv1x1.1} parent=68 // loop_body
                  %v448 = vld [vmem:[%s446] sm:$0xff]
                  %449 = vst [vmem:[%s447] sm:$0xff] %v448
                  %v450 = vld [vmem:[%s446 + $0x8] sm:$0xff]
                  %451 = vst [vmem:[%s447 + $0x8] sm:$0xff] %v450
                  %v452 = vld [vmem:[%s446 + $0xc8] sm:$0xff]
                  %453 = vst [vmem:[%s447 + $0x40] sm:$0xff] %v452
                  %v454 = vld [vmem:[%s446 + $0xd0] sm:$0xff]
                  %455 = vst [vmem:[%s447 + $0x48] sm:$0xff] %v454
                  %v456 = vld [vmem:[%s446 + $0x190] sm:$0xff]
                  %457 = vst [vmem:[%s447 + $0x80] sm:$0xff] %v456
                  %v458 = vld [vmem:[%s446 + $0x198] sm:$0xff]
                  %459 = vst [vmem:[%s447 + $0x88] sm:$0xff] %v458
                  %v460 = vld [vmem:[%s446 + $0x258] sm:$0xff]
                  %461 = vst [vmem:[%s447 + $0xc0] sm:$0xff] %v460
                  %v462 = vld [vmem:[%s446 + $0x260] sm:$0xff]
                  %463 = vst [vmem:[%s447 + $0xc8] sm:$0xff] %v462
                  %v464 = vld [vmem:[%s446 + $0x320] sm:$0xff]
                  %465 = vst [vmem:[%s447 + $0x100] sm:$0xff] %v464
                  %v466 = vld [vmem:[%s446 + $0x328] sm:$0xff]
                  %467 = vst [vmem:[%s447 + $0x108] sm:$0xff] %v466
                  %v468 = vld [vmem:[%s446 + $0x3e8] sm:$0xff]
                  %469 = vst [vmem:[%s447 + $0x140] sm:$0xff] %v468
                  %v470 = vld [vmem:[%s446 + $0x3f0] sm:$0xff]
                  %471 = vst [vmem:[%s447 + $0x148] sm:$0xff] %v470
                  %v472 = vld [vmem:[%s446 + $0x4b0] sm:$0xff]
                  %473 = vst [vmem:[%s447 + $0x180] sm:$0xff] %v472
                  %v474 = vld [vmem:[%s446 + $0x4b8] sm:$0xff]
                  %475 = vst [vmem:[%s447 + $0x188] sm:$0xff] %v474
                  %v476 = vld [vmem:[%s446 + $0x578] sm:$0xff]
                  %477 = vst [vmem:[%s447 + $0x1c0] sm:$0xff] %v476
                  %v478 = vld [vmem:[%s446 + $0x580] sm:$0xff]
                  %479 = vst [vmem:[%s447 + $0x1c8] sm:$0xff] %v478
                  %v480 = vld [vmem:[%s446 + $0x640] sm:$0xff]
                  %481 = vst [vmem:[%s447 + $0x200] sm:$0xff] %v480
                  %v482 = vld [vmem:[%s446 + $0x648] sm:$0xff]
                  %483 = vst [vmem:[%s447 + $0x208] sm:$0xff] %v482
                  %v484 = vld [vmem:[%s446 + $0x708] sm:$0xff]
                  %485 = vst [vmem:[%s447 + $0x240] sm:$0xff] %v484
                  %v486 = vld [vmem:[%s446 + $0x710] sm:$0xff]
                  %487 = vst [vmem:[%s447 + $0x248] sm:$0xff] %v486
                  %v488 = vld [vmem:[%s446 + $0x7d0] sm:$0xff]
                  %489 = vst [vmem:[%s447 + $0x280] sm:$0xff] %v488
                  %v490 = vld [vmem:[%s446 + $0x7d8] sm:$0xff]
                  %491 = vst [vmem:[%s447 + $0x288] sm:$0xff] %v490
                  %v492 = vld [vmem:[%s446 + $0x898] sm:$0xff]
                  %493 = vst [vmem:[%s447 + $0x2c0] sm:$0xff] %v492
                  %v494 = vld [vmem:[%s446 + $0x8a0] sm:$0xff]
                  %495 = vst [vmem:[%s447 + $0x2c8] sm:$0xff] %v494
                  %v496 = vld [vmem:[%s446 + $0x960] sm:$0xff]
                  %497 = vst [vmem:[%s447 + $0x300] sm:$0xff] %v496
                  %v498 = vld [vmem:[%s446 + $0x968] sm:$0xff]
                  %499 = vst [vmem:[%s447 + $0x308] sm:$0xff] %v498
                  %v500 = vld [vmem:[%s446 + $0xa28] sm:$0xff]
                  %501 = vst [vmem:[%s447 + $0x340] sm:$0xff] %v500
                  %v502 = vld [vmem:[%s446 + $0xa30] sm:$0xff]
                  %503 = vst [vmem:[%s447 + $0x348] sm:$0xff] %v502
                  %v504 = vld [vmem:[%s446 + $0xaf0] sm:$0xff]
                  %505 = vst [vmem:[%s447 + $0x380] sm:$0xff] %v504
                  %v506 = vld [vmem:[%s446 + $0xaf8] sm:$0xff]
                  %507 = vst [vmem:[%s447 + $0x388] sm:$0xff] %v506
                  %v508 = vld [vmem:[%s446 + $0xbb8] sm:$0xff]
                  %509 = vst [vmem:[%s447 + $0x3c0] sm:$0xff] %v508
                  %v510 = vld [vmem:[%s446 + $0xbc0] sm:$0xff]
                  %511 = vst [vmem:[%s447 + $0x3c8] sm:$0xff] %v510
                  %v512 = vld [vmem:[%s446 + $0xc80] sm:$0xff]
                  %513 = vst [vmem:[%s447 + $0x400] sm:$0xff] %v512
                  %v514 = vld [vmem:[%s446 + $0xc88] sm:$0xff]
                  %515 = vst [vmem:[%s447 + $0x408] sm:$0xff] %v514
                  %v516 = vld [vmem:[%s446 + $0xd48] sm:$0xff]
                  %517 = vst [vmem:[%s447 + $0x440] sm:$0xff] %v516
                  %v518 = vld [vmem:[%s446 + $0xd50] sm:$0xff]
                  %519 = vst [vmem:[%s447 + $0x448] sm:$0xff] %v518
                  %v520 = vld [vmem:[%s446 + $0xe10] sm:$0xff]
                  %521 = vst [vmem:[%s447 + $0x480] sm:$0xff] %v520
                  %v522 = vld [vmem:[%s446 + $0xe18] sm:$0xff]
                  %523 = vst [vmem:[%s447 + $0x488] sm:$0xff] %v522
                  %v524 = vld [vmem:[%s446 + $0xed8] sm:$0xff]
                  %525 = vst [vmem:[%s447 + $0x4c0] sm:$0xff] %v524
                  %v526 = vld [vmem:[%s446 + $0xee0] sm:$0xff]
                  %527 = vst [vmem:[%s447 + $0x4c8] sm:$0xff] %v526
                  %v528 = vld [vmem:[%s446 + $0xfa0] sm:$0xff]
                  %529 = vst [vmem:[%s447 + $0x500] sm:$0xff] %v528
                  %v530 = vld [vmem:[%s446 + $0xfa8] sm:$0xff]
                  %531 = vst [vmem:[%s447 + $0x508] sm:$0xff] %v530
                  %v532 = vld [vmem:[%s446 + $0x1068] sm:$0xff]
                  %533 = vst [vmem:[%s447 + $0x540] sm:$0xff] %v532
                  %v534 = vld [vmem:[%s446 + $0x1070] sm:$0xff]
                  %535 = vst [vmem:[%s447 + $0x548] sm:$0xff] %v534
                  %v536 = vld [vmem:[%s446 + $0x1130] sm:$0xff]
                  %537 = vst [vmem:[%s447 + $0x580] sm:$0xff] %v536
                  %v538 = vld [vmem:[%s446 + $0x1138] sm:$0xff]
                  %539 = vst [vmem:[%s447 + $0x588] sm:$0xff] %v538
                  %v540 = vld [vmem:[%s446 + $0x11f8] sm:$0xff]
                  %541 = vst [vmem:[%s447 + $0x5c0] sm:$0xff] %v540
                  %v542 = vld [vmem:[%s446 + $0x1200] sm:$0xff]
                  %543 = vst [vmem:[%s447 + $0x5c8] sm:$0xff] %v542
                  %s544 = sadd.s32 1, %s445
                  %p545 = scmp.ge.s32.totalorder %s544, %s438
                  %s546 = scalar_select %p545, 0, %s544
                  %s547 = smul.u32 %s546, 16
                  %s548 = smul.u32 %s546, 16
                  %s549 = scalar_lea.vmem %s169, %s547
                  %s550 = scalar_lea.vmem %s159, %s548 [#allocation2]
                $region74: #{se_mul_conv1x1.1} parent=68 // loop_footer
                  %s442 = sadd.s32 %s440, 1
                $region75: #{se_mul_conv1x1.1} parent=68 // loop_footer_branch
                  %439 = sbr.rel target = $region71
                $region76: #{se_mul_conv1x1.1} parent=68 // loop_exit
                  _
                %s551 = sshrl.u32 %s437, 1
                %s552 = sand.u32 %s437, 1
                %s553 = smul.u32 %s551, 2
                %s554 = smul.u32 8, %s553
                %s555 = scalar_lea.vmem %s169, %s554
                %s556 = smul.u32 8, %s553
                %s557 = scalar_lea.vmem %s159, %s556 [#allocation2]
                // While loop
                $region77: #{se_mul_conv1x1.1} parent=68 // loop_pre_header
                  _
                $region78: #{se_mul_conv1x1.1} parent=68 // loop_header
                  %s559 = sphi 0, %s561
                  %p560 = scmp.ge.s32.totalorder %s559, %s552
                  %s564 = sphi 0, %s617
                  %s565 = sphi %s555, %s620
                  %s566 = sphi %s557, %s621
                $region79: #{se_mul_conv1x1.1} parent=68 // loop_header_branch
                  %563 = sbr.rel (%p560) target = $region83
                $region80: #{se_mul_conv1x1.1} parent=68 // loop_body
                  %v567 = vld [vmem:[%s565] sm:$0xff]
                  %568 = vst [vmem:[%s566] sm:$0xff] %v567
                  %v569 = vld [vmem:[%s565 + $0xc8] sm:$0xff]
                  %570 = vst [vmem:[%s566 + $0x40] sm:$0xff] %v569
                  %v571 = vld [vmem:[%s565 + $0x190] sm:$0xff]
                  %572 = vst [vmem:[%s566 + $0x80] sm:$0xff] %v571
                  %v573 = vld [vmem:[%s565 + $0x258] sm:$0xff]
                  %574 = vst [vmem:[%s566 + $0xc0] sm:$0xff] %v573
                  %v575 = vld [vmem:[%s565 + $0x320] sm:$0xff]
                  %576 = vst [vmem:[%s566 + $0x100] sm:$0xff] %v575
                  %v577 = vld [vmem:[%s565 + $0x3e8] sm:$0xff]
                  %578 = vst [vmem:[%s566 + $0x140] sm:$0xff] %v577
                  %v579 = vld [vmem:[%s565 + $0x4b0] sm:$0xff]
                  %580 = vst [vmem:[%s566 + $0x180] sm:$0xff] %v579
                  %v581 = vld [vmem:[%s565 + $0x578] sm:$0xff]
                  %582 = vst [vmem:[%s566 + $0x1c0] sm:$0xff] %v581
                  %v583 = vld [vmem:[%s565 + $0x640] sm:$0xff]
                  %584 = vst [vmem:[%s566 + $0x200] sm:$0xff] %v583
                  %v585 = vld [vmem:[%s565 + $0x708] sm:$0xff]
                  %586 = vst [vmem:[%s566 + $0x240] sm:$0xff] %v585
                  %v587 = vld [vmem:[%s565 + $0x7d0] sm:$0xff]
                  %588 = vst [vmem:[%s566 + $0x280] sm:$0xff] %v587
                  %v589 = vld [vmem:[%s565 + $0x898] sm:$0xff]
                  %590 = vst [vmem:[%s566 + $0x2c0] sm:$0xff] %v589
                  %v591 = vld [vmem:[%s565 + $0x960] sm:$0xff]
                  %592 = vst [vmem:[%s566 + $0x300] sm:$0xff] %v591
                  %v593 = vld [vmem:[%s565 + $0xa28] sm:$0xff]
                  %594 = vst [vmem:[%s566 + $0x340] sm:$0xff] %v593
                  %v595 = vld [vmem:[%s565 + $0xaf0] sm:$0xff]
                  %596 = vst [vmem:[%s566 + $0x380] sm:$0xff] %v595
                  %v597 = vld [vmem:[%s565 + $0xbb8] sm:$0xff]
                  %598 = vst [vmem:[%s566 + $0x3c0] sm:$0xff] %v597
                  %v599 = vld [vmem:[%s565 + $0xc80] sm:$0xff]
                  %600 = vst [vmem:[%s566 + $0x400] sm:$0xff] %v599
                  %v601 = vld [vmem:[%s565 + $0xd48] sm:$0xff]
                  %602 = vst [vmem:[%s566 + $0x440] sm:$0xff] %v601
                  %v603 = vld [vmem:[%s565 + $0xe10] sm:$0xff]
                  %604 = vst [vmem:[%s566 + $0x480] sm:$0xff] %v603
                  %v605 = vld [vmem:[%s565 + $0xed8] sm:$0xff]
                  %606 = vst [vmem:[%s566 + $0x4c0] sm:$0xff] %v605
                  %v607 = vld [vmem:[%s565 + $0xfa0] sm:$0xff]
                  %608 = vst [vmem:[%s566 + $0x500] sm:$0xff] %v607
                  %v609 = vld [vmem:[%s565 + $0x1068] sm:$0xff]
                  %610 = vst [vmem:[%s566 + $0x540] sm:$0xff] %v609
                  %v611 = vld [vmem:[%s565 + $0x1130] sm:$0xff]
                  %612 = vst [vmem:[%s566 + $0x580] sm:$0xff] %v611
                  %v613 = vld [vmem:[%s565 + $0x11f8] sm:$0xff]
                  %614 = vst [vmem:[%s566 + $0x5c0] sm:$0xff] %v613
                  %s615 = sadd.s32 1, %s564
                  %p616 = scmp.ge.s32.totalorder %s615, %s552
                  %s617 = scalar_select %p616, 0, %s615
                  %s618 = smul.u32 %s617, 8
                  %s619 = smul.u32 %s617, 8
                  %s620 = scalar_lea.vmem %s555, %s618
                  %s621 = scalar_lea.vmem %s557, %s619 [#allocation2]
                $region81: #{se_mul_conv1x1.1} parent=68 // loop_footer
                  %s561 = sadd.s32 %s559, 1
                $region82: #{se_mul_conv1x1.1} parent=68 // loop_footer_branch
                  %558 = sbr.rel target = $region78
                $region83: #{se_mul_conv1x1.1} parent=68 // loop_exit
                  _
                %s622 = sshll.u32 1, %s432
                %s623 = ssub.s32 %s622, 1
                loop: start=0, step=1, limit=1
                $region84: #{se_mul_conv1x1.1} parent=68 // loop_pre_header
                  _
                $region85: #{se_mul_conv1x1.1} parent=68 // loop_header
                  %s625 = sphi 0, %s629
                  %p626 = scmp.ge.s32.totalorder %s625, 1
                  %s630 = sphi %s434, %s434
                  %s631 = sphi %s436, %s436
                $region86: #{se_mul_conv1x1.1} parent=68 // loop_header_branch
                  %628 = sbr.rel (%p626) target = $region90
                $region87: #{se_mul_conv1x1.1} parent=68 // loop_body
                  %v632 = vld [vmem:[%s630] sm:%s623]
                  %633 = vst [vmem:[%s631] sm:%s623] %v632
                  %v634 = vld [vmem:[%s630 + $0xc8] sm:%s623]
                  %635 = vst [vmem:[%s631 + $0x40] sm:%s623] %v634
                  %v636 = vld [vmem:[%s630 + $0x190] sm:%s623]
                  %637 = vst [vmem:[%s631 + $0x80] sm:%s623] %v636
                  %v638 = vld [vmem:[%s630 + $0x258] sm:%s623]
                  %639 = vst [vmem:[%s631 + $0xc0] sm:%s623] %v638
                  %v640 = vld [vmem:[%s630 + $0x320] sm:%s623]
                  %641 = vst [vmem:[%s631 + $0x100] sm:%s623] %v640
                  %v642 = vld [vmem:[%s630 + $0x3e8] sm:%s623]
                  %643 = vst [vmem:[%s631 + $0x140] sm:%s623] %v642
                  %v644 = vld [vmem:[%s630 + $0x4b0] sm:%s623]
                  %645 = vst [vmem:[%s631 + $0x180] sm:%s623] %v644
                  %v646 = vld [vmem:[%s630 + $0x578] sm:%s623]
                  %647 = vst [vmem:[%s631 + $0x1c0] sm:%s623] %v646
                  %v648 = vld [vmem:[%s630 + $0x640] sm:%s623]
                  %649 = vst [vmem:[%s631 + $0x200] sm:%s623] %v648
                  %v650 = vld [vmem:[%s630 + $0x708] sm:%s623]
                  %651 = vst [vmem:[%s631 + $0x240] sm:%s623] %v650
                  %v652 = vld [vmem:[%s630 + $0x7d0] sm:%s623]
                  %653 = vst [vmem:[%s631 + $0x280] sm:%s623] %v652
                  %v654 = vld [vmem:[%s630 + $0x898] sm:%s623]
                  %655 = vst [vmem:[%s631 + $0x2c0] sm:%s623] %v654
                  %v656 = vld [vmem:[%s630 + $0x960] sm:%s623]
                  %657 = vst [vmem:[%s631 + $0x300] sm:%s623] %v656
                  %v658 = vld [vmem:[%s630 + $0xa28] sm:%s623]
                  %659 = vst [vmem:[%s631 + $0x340] sm:%s623] %v658
                  %v660 = vld [vmem:[%s630 + $0xaf0] sm:%s623]
                  %661 = vst [vmem:[%s631 + $0x380] sm:%s623] %v660
                  %v662 = vld [vmem:[%s630 + $0xbb8] sm:%s623]
                  %663 = vst [vmem:[%s631 + $0x3c0] sm:%s623] %v662
                  %v664 = vld [vmem:[%s630 + $0xc80] sm:%s623]
                  %665 = vst [vmem:[%s631 + $0x400] sm:%s623] %v664
                  %v666 = vld [vmem:[%s630 + $0xd48] sm:%s623]
                  %667 = vst [vmem:[%s631 + $0x440] sm:%s623] %v666
                  %v668 = vld [vmem:[%s630 + $0xe10] sm:%s623]
                  %669 = vst [vmem:[%s631 + $0x480] sm:%s623] %v668
                  %v670 = vld [vmem:[%s630 + $0xed8] sm:%s623]
                  %671 = vst [vmem:[%s631 + $0x4c0] sm:%s623] %v670
                  %v672 = vld [vmem:[%s630 + $0xfa0] sm:%s623]
                  %673 = vst [vmem:[%s631 + $0x500] sm:%s623] %v672
                  %v674 = vld [vmem:[%s630 + $0x1068] sm:%s623]
                  %675 = vst [vmem:[%s631 + $0x540] sm:%s623] %v674
                  %v676 = vld [vmem:[%s630 + $0x1130] sm:%s623]
                  %677 = vst [vmem:[%s631 + $0x580] sm:%s623] %v676
                  %v678 = vld [vmem:[%s630 + $0x11f8] sm:%s623]
                  %679 = vst [vmem:[%s631 + $0x5c0] sm:%s623] %v678
                $region88: #{se_mul_conv1x1.1} parent=68 // loop_footer
                  %s629 = sadd.s32 1, %s625
                $region89: #{se_mul_conv1x1.1} parent=68 // loop_footer_branch
                  %624 = sbr.rel target = $region85
                $region90: #{se_mul_conv1x1.1} parent=68 // loop_exit
                  _
              $region69: #{se_mul_conv1x1.1} parent=35 // pred_fallthru
                _
            $region36: #{se_mul_conv1x1.1} parent=31 // pred_fallthru
              _
            // Predicated region
            $region37: #{se_mul_conv1x1.1} parent=31 // pred_check
              %p178 = pneg %p174
            $region38: #{se_mul_conv1x1.1} parent=31 // pred_check_branch
              %180 = sbr.rel (%p178) target = $region40
            $region39: #{se_mul_conv1x1.1} parent=31 // pred_region
              %s181 = sshll.u32 1, %s170
              %s182 = ssub.s32 %s181, 1
              loop: start=0, step=1, limit=1
              $region41: #{se_mul_conv1x1.1} parent=39 // loop_pre_header
                _
              $region42: #{se_mul_conv1x1.1} parent=39 // loop_header
                %s184 = sphi 0, %s188
                %p185 = scmp.ge.s32.totalorder %s184, 1
                %s189 = sphi %s169, %s169
                %s190 = sphi %s159, %s159
              $region43: #{se_mul_conv1x1.1} parent=39 // loop_header_branch
                %187 = sbr.rel (%p185) target = $region47
              $region44: #{se_mul_conv1x1.1} parent=39 // loop_body
                %v191 = vld [vmem:[%s189] sm:%s182]
                %192 = vst [vmem:[%s190] sm:%s182] %v191
                %v193 = vld [vmem:[%s189 + $0xc8] sm:%s182]
                %194 = vst [vmem:[%s190 + $0x40] sm:%s182] %v193
                %v195 = vld [vmem:[%s189 + $0x190] sm:%s182]
                %196 = vst [vmem:[%s190 + $0x80] sm:%s182] %v195
                %v197 = vld [vmem:[%s189 + $0x258] sm:%s182]
                %198 = vst [vmem:[%s190 + $0xc0] sm:%s182] %v197
                %v199 = vld [vmem:[%s189 + $0x320] sm:%s182]
                %200 = vst [vmem:[%s190 + $0x100] sm:%s182] %v199
                %v201 = vld [vmem:[%s189 + $0x3e8] sm:%s182]
                %202 = vst [vmem:[%s190 + $0x140] sm:%s182] %v201
                %v203 = vld [vmem:[%s189 + $0x4b0] sm:%s182]
                %204 = vst [vmem:[%s190 + $0x180] sm:%s182] %v203
                %v205 = vld [vmem:[%s189 + $0x578] sm:%s182]
                %206 = vst [vmem:[%s190 + $0x1c0] sm:%s182] %v205
                %v207 = vld [vmem:[%s189 + $0x640] sm:%s182]
                %208 = vst [vmem:[%s190 + $0x200] sm:%s182] %v207
                %v209 = vld [vmem:[%s189 + $0x708] sm:%s182]
                %210 = vst [vmem:[%s190 + $0x240] sm:%s182] %v209
                %v211 = vld [vmem:[%s189 + $0x7d0] sm:%s182]
                %212 = vst [vmem:[%s190 + $0x280] sm:%s182] %v211
                %v213 = vld [vmem:[%s189 + $0x898] sm:%s182]
                %214 = vst [vmem:[%s190 + $0x2c0] sm:%s182] %v213
                %v215 = vld [vmem:[%s189 + $0x960] sm:%s182]
                %216 = vst [vmem:[%s190 + $0x300] sm:%s182] %v215
                %v217 = vld [vmem:[%s189 + $0xa28] sm:%s182]
                %218 = vst [vmem:[%s190 + $0x340] sm:%s182] %v217
                %v219 = vld [vmem:[%s189 + $0xaf0] sm:%s182]
                %220 = vst [vmem:[%s190 + $0x380] sm:%s182] %v219
                %v221 = vld [vmem:[%s189 + $0xbb8] sm:%s182]
                %222 = vst [vmem:[%s190 + $0x3c0] sm:%s182] %v221
                %v223 = vld [vmem:[%s189 + $0xc80] sm:%s182]
                %224 = vst [vmem:[%s190 + $0x400] sm:%s182] %v223
                %v225 = vld [vmem:[%s189 + $0xd48] sm:%s182]
                %226 = vst [vmem:[%s190 + $0x440] sm:%s182] %v225
                %v227 = vld [vmem:[%s189 + $0xe10] sm:%s182]
                %228 = vst [vmem:[%s190 + $0x480] sm:%s182] %v227
                %v229 = vld [vmem:[%s189 + $0xed8] sm:%s182]
                %230 = vst [vmem:[%s190 + $0x4c0] sm:%s182] %v229
                %v231 = vld [vmem:[%s189 + $0xfa0] sm:%s182]
                %232 = vst [vmem:[%s190 + $0x500] sm:%s182] %v231
                %v233 = vld [vmem:[%s189 + $0x1068] sm:%s182]
                %234 = vst [vmem:[%s190 + $0x540] sm:%s182] %v233
                %v235 = vld [vmem:[%s189 + $0x1130] sm:%s182]
                %236 = vst [vmem:[%s190 + $0x580] sm:%s182] %v235
                %v237 = vld [vmem:[%s189 + $0x11f8] sm:%s182]
                %238 = vst [vmem:[%s190 + $0x5c0] sm:%s182] %v237
              $region45: #{se_mul_conv1x1.1} parent=39 // loop_footer
                %s188 = sadd.s32 1, %s184
              $region46: #{se_mul_conv1x1.1} parent=39 // loop_footer_branch
                %183 = sbr.rel target = $region42
              $region47: #{se_mul_conv1x1.1} parent=39 // loop_exit
                _
            $region40: #{se_mul_conv1x1.1} parent=31 // pred_fallthru
              _
          $region32: #{se_mul_conv1x1.1} parent=27 // pred_fallthru
            _
          %680 = vnop
        $region28: #{se_mul_conv1x1.1} parent=23 // pred_fallthru
          _
      $region24: #{se_mul_conv1x1.1} parent=5 // pred_fallthru
        _
      %p681 = scmp.le.s32.totalorder 1, %s9
      %p682 = scmp.lt.s32.totalorder %s9, 5
      %p683 = pnand %p681, %p682
      %p684 = pneg %p683
      // Predicated region
      $region91: #{se_mul_conv1x1.1} parent=5 // pred_check
        _
      $region92: #{se_mul_conv1x1.1} parent=5 // pred_check_branch
        %686 = sbr.rel (%p683) target = $region94
      $region93: #{se_mul_conv1x1.1} parent=5 // pred_region
        %s687 = ssub.s32 %s9, 1
        %s688 = sand.u32 %s83, 1
        %s689 = sand.u32 %s83, 1
        %s690 = smul.addr %s689, 1536
        %s691 = scalar_lea.vmem [#allocation2], %s690
        // Predicated region
        $region95: #{se_mul_conv1x1.1} parent=93 // pred_check
          %p692 = pneg %p96
        $region96: #{se_mul_conv1x1.1} parent=93 // pred_check_branch
          %694 = sbr.rel (%p692) target = $region98
        $region97: #{se_mul_conv1x1.1} parent=93 // pred_region
          _
        $region98: #{se_mul_conv1x1.1} parent=93 // pred_fallthru
          _
        %p695 = scmp.lt.s32.totalorder %s18, 0
        %s696 = scalar_select %p695, %s18, 0
        %s697 = smul.addr %s696, 2
        %s698 = scalar_lea.vmem %s0, %s697
        %p699 = pneg %p47
        %p700 = pneg %p44
        %p701 = pneg %p68
        %p702 = pneg %p65
        %s703 = sand.u32 %s83, 1
        %s704 = sand.u32 %s83, 1
        %s705 = smul.addr %s704, 1536
        %s706 = scalar_lea.vmem [#allocation2], %s705
        %p707 = pneg %p96
        %p708 = pneg %p93
        %p709 = pneg %p124
        %p710 = pneg %p121
        %s711 = sand.u32 %s111, 1
        %s712 = sand.u32 %s111, 1
        %s713 = smul.addr %s712, 384
        %s714 = scalar_lea.vmem [#allocation3], %s713
        %p715 = scmp.lt.s32.totalorder %s18, 0
        %s716 = scalar_select %p715, %s18, 0
        %s717 = smul.addr %s716, 2
        %s718 = scalar_lea.vmem %s0, %s717
        %s719 = smul.u32 8, %s19
        %s720 = ssub.s32 25, %s719
        %p721 = scmp.lt.s32.totalorder %s720, 8
        %s722 = scalar_select %p721, %s720, 8
        %s723 = smul.u32 192, %s722
        %s724 = smul.u32 8, %s19
        %s725 = ssub.s32 25, %s724
        %p726 = scmp.lt.s32.totalorder %s725, 8
        %s727 = scalar_select %p726, %s725, 8
        %s728 = smul.u32 48, %s727
        %v729 = vld [vmem:[%s718] sm:$0x3]
        %v730 = vxor.u32 %v729, 2147483648
        %v731 = vmul.f32 %v730, 1.442695
        %v732 = vpow.pop %v731
        %v733 = vadd.f32 %v732, 1.0
        %v734 = vrcp.pop %v733
        %v735 = vmul.f32 %v733, %v734
        %v736 = vsub.f32 1.0, %v735
        %v737 = vmul.f32 %v734, %v736
        %v738 = vadd.f32 %v734, %v737
        %vm739 = vweird.f32 %v733
        %vm740 = vweird.f32 %v734
        %vm741 = vmor %vm739, %vm740
        %v742 = vsel %vm741, %v734, %v738
        %v743 = vand.u32 2147483647, %v733
        %vm744 = vcmp.eq.f32.partialorder %v743, 8.507059e+37
        %v745 = vand.u32 %v733, 2147483648
        %v746 = vor.u32 1.1754944e-38, %v745
        %v747 = vsel %vm744, %v746, %v742
        %v748 = vmul.f32 1.0, %v747
        %v749 = vld [vmem:[%s1] sm:$0xff]
        %v750 = vld [vmem:[%s1 + $0x8] sm:$0xff]
        %v751 = vld [vmem:[%s1 + $0x10] sm:$0xff]
        %v752 = vld [vmem:[%s1 + $0x18] sm:$0xff]
        %v753 = vld [vmem:[%s1 + $0x20] sm:$0xff]
        %v754 = vld [vmem:[%s1 + $0x28] sm:$0xff]
        %v755 = vld [vmem:[%s1 + $0x30] sm:$0xff]
        %v756 = vld [vmem:[%s1 + $0x38] sm:$0xff]
        %v757 = vld [vmem:[%s1 + $0x40] sm:$0xff]
        %v758 = vld [vmem:[%s1 + $0x48] sm:$0xff]
        %v759 = vld [vmem:[%s1 + $0x50] sm:$0xff]
        %v760 = vld [vmem:[%s1 + $0x58] sm:$0xff]
        %v762 = vperm.slane %v748, 0
        %v763 = vperm.slane %v748, 1
        %v766 = vmul.f32 %v749, %v762
        %v767 = vmul.f32 %v750, %v763
        %v768 = vmul.f32 %v751, %v762
        %v769 = vmul.f32 %v752, %v763
        %v770 = vmul.f32 %v753, %v762
        %v771 = vmul.f32 %v754, %v763
        %v772 = vmul.f32 %v755, %v762
        %v773 = vmul.f32 %v756, %v763
        %v774 = vmul.f32 %v757, %v762
        %v775 = vmul.f32 %v758, %v763
        %v776 = vmul.f32 %v759, %v762
        %v777 = vmul.f32 %v760, %v763
        %v778 = vld [vmem:[%s691] sm:$0xff]
        %v779 = vld [vmem:[%s691 + $0x8] sm:$0xff]
        %v780 = vld [vmem:[%s691 + $0x10] sm:$0xff]
        %v781 = vld [vmem:[%s691 + $0x18] sm:$0xff]
        %v782 = vld [vmem:[%s691 + $0x20] sm:$0xff]
        %v783 = vld [vmem:[%s691 + $0x28] sm:$0xff]
        %v784 = vld [vmem:[%s691 + $0x30] sm:$0xff]
        %v785 = vld [vmem:[%s691 + $0x38] sm:$0xff]
        %v786 = vld [vmem:[%s691 + $0x40] sm:$0xff]
        %v787 = vld [vmem:[%s691 + $0x48] sm:$0xff]
        %v788 = vld [vmem:[%s691 + $0x50] sm:$0xff]
        %v789 = vld [vmem:[%s691 + $0x58] sm:$0xff]
        %v790 = vld [vmem:[%s691 + $0x60] sm:$0xff]
        %v791 = vld [vmem:[%s691 + $0x68] sm:$0xff]
        %v792 = vld [vmem:[%s691 + $0x70] sm:$0xff]
        %v793 = vld [vmem:[%s691 + $0x78] sm:$0xff]
        %v794 = vld [vmem:[%s691 + $0x80] sm:$0xff]
        %v795 = vld [vmem:[%s691 + $0x88] sm:$0xff]
        %v796 = vld [vmem:[%s691 + $0x90] sm:$0xff]
        %v797 = vld [vmem:[%s691 + $0x98] sm:$0xff]
        %v798 = vld [vmem:[%s691 + $0xa0] sm:$0xff]
        %v799 = vld [vmem:[%s691 + $0xa8] sm:$0xff]
        %v800 = vld [vmem:[%s691 + $0xb0] sm:$0xff]
        %v801 = vld [vmem:[%s691 + $0xb8] sm:$0xff]
        %v802 = vld [vmem:[%s691 + $0xc0] sm:$0xff]
        %v803 = vld [vmem:[%s691 + $0xc8] sm:$0xff]
        %v804 = vld [vmem:[%s691 + $0xd0] sm:$0xff]
        %v805 = vld [vmem:[%s691 + $0xd8] sm:$0xff]
        %v806 = vld [vmem:[%s691 + $0xe0] sm:$0xff]
        %v807 = vld [vmem:[%s691 + $0xe8] sm:$0xff]
        %v808 = vld [vmem:[%s691 + $0xf0] sm:$0xff]
        %v809 = vld [vmem:[%s691 + $0xf8] sm:$0xff]
        %v810 = vld [vmem:[%s691 + $0x100] sm:$0xff]
        %v811 = vld [vmem:[%s691 + $0x108] sm:$0xff]
        %v812 = vld [vmem:[%s691 + $0x110] sm:$0xff]
        %v813 = vld [vmem:[%s691 + $0x118] sm:$0xff]
        %v814 = vld [vmem:[%s691 + $0x120] sm:$0xff]
        %v815 = vld [vmem:[%s691 + $0x128] sm:$0xff]
        %v816 = vld [vmem:[%s691 + $0x130] sm:$0xff]
        %v817 = vld [vmem:[%s691 + $0x138] sm:$0xff]
        %v818 = vld [vmem:[%s691 + $0x140] sm:$0xff]
        %v819 = vld [vmem:[%s691 + $0x148] sm:$0xff]
        %v820 = vld [vmem:[%s691 + $0x150] sm:$0xff]
        %v821 = vld [vmem:[%s691 + $0x158] sm:$0xff]
        %v822 = vld [vmem:[%s691 + $0x160] sm:$0xff]
        %v823 = vld [vmem:[%s691 + $0x168] sm:$0xff]
        %v824 = vld [vmem:[%s691 + $0x170] sm:$0xff]
        %v825 = vld [vmem:[%s691 + $0x178] sm:$0xff]
        %v826 = vld [vmem:[%s691 + $0x180] sm:$0xff]
        %v827 = vld [vmem:[%s691 + $0x188] sm:$0xff]
        %v828 = vld [vmem:[%s691 + $0x190] sm:$0xff]
        %v829 = vld [vmem:[%s691 + $0x198] sm:$0xff]
        %v830 = vld [vmem:[%s691 + $0x1a0] sm:$0xff]
        %v831 = vld [vmem:[%s691 + $0x1a8] sm:$0xff]
        %v832 = vld [vmem:[%s691 + $0x1b0] sm:$0xff]
        %v833 = vld [vmem:[%s691 + $0x1b8] sm:$0xff]
        %v834 = vld [vmem:[%s691 + $0x1c0] sm:$0xff]
        %v835 = vld [vmem:[%s691 + $0x1c8] sm:$0xff]
        %v836 = vld [vmem:[%s691 + $0x1d0] sm:$0xff]
        %v837 = vld [vmem:[%s691 + $0x1d8] sm:$0xff]
        %v838 = vld [vmem:[%s691 + $0x1e0] sm:$0xff]
        %v839 = vld [vmem:[%s691 + $0x1e8] sm:$0xff]
        %v840 = vld [vmem:[%s691 + $0x1f0] sm:$0xff]
        %v841 = vld [vmem:[%s691 + $0x1f8] sm:$0xff]
        %v842 = vld [vmem:[%s691 + $0x200] sm:$0xff]
        %v843 = vld [vmem:[%s691 + $0x208] sm:$0xff]
        %v844 = vld [vmem:[%s691 + $0x210] sm:$0xff]
        %v845 = vld [vmem:[%s691 + $0x218] sm:$0xff]
        %v846 = vld [vmem:[%s691 + $0x220] sm:$0xff]
        %v847 = vld [vmem:[%s691 + $0x228] sm:$0xff]
        %v848 = vld [vmem:[%s691 + $0x230] sm:$0xff]
        %v849 = vld [vmem:[%s691 + $0x238] sm:$0xff]
        %v850 = vld [vmem:[%s691 + $0x240] sm:$0xff]
        %v851 = vld [vmem:[%s691 + $0x248] sm:$0xff]
        %v852 = vld [vmem:[%s691 + $0x250] sm:$0xff]
        %v853 = vld [vmem:[%s691 + $0x258] sm:$0xff]
        %v854 = vld [vmem:[%s691 + $0x260] sm:$0xff]
        %v855 = vld [vmem:[%s691 + $0x268] sm:$0xff]
        %v856 = vld [vmem:[%s691 + $0x270] sm:$0xff]
        %v857 = vld [vmem:[%s691 + $0x278] sm:$0xff]
        %v858 = vld [vmem:[%s691 + $0x280] sm:$0xff]
        %v859 = vld [vmem:[%s691 + $0x288] sm:$0xff]
        %v860 = vld [vmem:[%s691 + $0x290] sm:$0xff]
        %v861 = vld [vmem:[%s691 + $0x298] sm:$0xff]
        %v862 = vld [vmem:[%s691 + $0x2a0] sm:$0xff]
        %v863 = vld [vmem:[%s691 + $0x2a8] sm:$0xff]
        %v864 = vld [vmem:[%s691 + $0x2b0] sm:$0xff]
        %v865 = vld [vmem:[%s691 + $0x2b8] sm:$0xff]
        %v866 = vld [vmem:[%s691 + $0x2c0] sm:$0xff]
        %v867 = vld [vmem:[%s691 + $0x2c8] sm:$0xff]
        %v868 = vld [vmem:[%s691 + $0x2d0] sm:$0xff]
        %v869 = vld [vmem:[%s691 + $0x2d8] sm:$0xff]
        %v870 = vld [vmem:[%s691 + $0x2e0] sm:$0xff]
        %v871 = vld [vmem:[%s691 + $0x2e8] sm:$0xff]
        %v872 = vld [vmem:[%s691 + $0x2f0] sm:$0xff]
        %v873 = vld [vmem:[%s691 + $0x2f8] sm:$0xff]
        %v874 = vld [vmem:[%s691 + $0x300] sm:$0xff]
        %v875 = vld [vmem:[%s691 + $0x308] sm:$0xff]
        %v876 = vld [vmem:[%s691 + $0x310] sm:$0xff]
        %v877 = vld [vmem:[%s691 + $0x318] sm:$0xff]
        %v878 = vld [vmem:[%s691 + $0x320] sm:$0xff]
        %v879 = vld [vmem:[%s691 + $0x328] sm:$0xff]
        %v880 = vld [vmem:[%s691 + $0x330] sm:$0xff]
        %v881 = vld [vmem:[%s691 + $0x338] sm:$0xff]
        %v882 = vld [vmem:[%s691 + $0x340] sm:$0xff]
        %v883 = vld [vmem:[%s691 + $0x348] sm:$0xff]
        %v884 = vld [vmem:[%s691 + $0x350] sm:$0xff]
        %v885 = vld [vmem:[%s691 + $0x358] sm:$0xff]
        %v886 = vld [vmem:[%s691 + $0x360] sm:$0xff]
        %v887 = vld [vmem:[%s691 + $0x368] sm:$0xff]
        %v888 = vld [vmem:[%s691 + $0x370] sm:$0xff]
        %v889 = vld [vmem:[%s691 + $0x378] sm:$0xff]
        %v890 = vld [vmem:[%s691 + $0x380] sm:$0xff]
        %v891 = vld [vmem:[%s691 + $0x388] sm:$0xff]
        %v892 = vld [vmem:[%s691 + $0x390] sm:$0xff]
        %v893 = vld [vmem:[%s691 + $0x398] sm:$0xff]
        %v894 = vld [vmem:[%s691 + $0x3a0] sm:$0xff]
        %v895 = vld [vmem:[%s691 + $0x3a8] sm:$0xff]
        %v896 = vld [vmem:[%s691 + $0x3b0] sm:$0xff]
        %v897 = vld [vmem:[%s691 + $0x3b8] sm:$0xff]
        %v898 = vld [vmem:[%s691 + $0x3c0] sm:$0xff]
        %v899 = vld [vmem:[%s691 + $0x3c8] sm:$0xff]
        %v900 = vld [vmem:[%s691 + $0x3d0] sm:$0xff]
        %v901 = vld [vmem:[%s691 + $0x3d8] sm:$0xff]
        %v902 = vld [vmem:[%s691 + $0x3e0] sm:$0xff]
        %v903 = vld [vmem:[%s691 + $0x3e8] sm:$0xff]
        %v904 = vld [vmem:[%s691 + $0x3f0] sm:$0xff]
        %v905 = vld [vmem:[%s691 + $0x3f8] sm:$0xff]
        %v906 = vld [vmem:[%s691 + $0x400] sm:$0xff]
        %v907 = vld [vmem:[%s691 + $0x408] sm:$0xff]
        %v908 = vld [vmem:[%s691 + $0x410] sm:$0xff]
        %v909 = vld [vmem:[%s691 + $0x418] sm:$0xff]
        %v910 = vld [vmem:[%s691 + $0x420] sm:$0xff]
        %v911 = vld [vmem:[%s691 + $0x428] sm:$0xff]
        %v912 = vld [vmem:[%s691 + $0x430] sm:$0xff]
        %v913 = vld [vmem:[%s691 + $0x438] sm:$0xff]
        %v914 = vld [vmem:[%s691 + $0x440] sm:$0xff]
        %v915 = vld [vmem:[%s691 + $0x448] sm:$0xff]
        %v916 = vld [vmem:[%s691 + $0x450] sm:$0xff]
        %v917 = vld [vmem:[%s691 + $0x458] sm:$0xff]
        %v918 = vld [vmem:[%s691 + $0x460] sm:$0xff]
        %v919 = vld [vmem:[%s691 + $0x468] sm:$0xff]
        %v920 = vld [vmem:[%s691 + $0x470] sm:$0xff]
        %v921 = vld [vmem:[%s691 + $0x478] sm:$0xff]
        %v922 = vld [vmem:[%s691 + $0x480] sm:$0xff]
        %v923 = vld [vmem:[%s691 + $0x488] sm:$0xff]
        %v924 = vld [vmem:[%s691 + $0x490] sm:$0xff]
        %v925 = vld [vmem:[%s691 + $0x498] sm:$0xff]
        %v926 = vld [vmem:[%s691 + $0x4a0] sm:$0xff]
        %v927 = vld [vmem:[%s691 + $0x4a8] sm:$0xff]
        %v928 = vld [vmem:[%s691 + $0x4b0] sm:$0xff]
        %v929 = vld [vmem:[%s691 + $0x4b8] sm:$0xff]
        %v930 = vld [vmem:[%s691 + $0x4c0] sm:$0xff]
        %v931 = vld [vmem:[%s691 + $0x4c8] sm:$0xff]
        %v932 = vld [vmem:[%s691 + $0x4d0] sm:$0xff]
        %v933 = vld [vmem:[%s691 + $0x4d8] sm:$0xff]
        %v934 = vld [vmem:[%s691 + $0x4e0] sm:$0xff]
        %v935 = vld [vmem:[%s691 + $0x4e8] sm:$0xff]
        %v936 = vld [vmem:[%s691 + $0x4f0] sm:$0xff]
        %v937 = vld [vmem:[%s691 + $0x4f8] sm:$0xff]
        %v938 = vld [vmem:[%s691 + $0x500] sm:$0xff]
        %v939 = vld [vmem:[%s691 + $0x508] sm:$0xff]
        %v940 = vld [vmem:[%s691 + $0x510] sm:$0xff]
        %v941 = vld [vmem:[%s691 + $0x518] sm:$0xff]
        %v942 = vld [vmem:[%s691 + $0x520] sm:$0xff]
        %v943 = vld [vmem:[%s691 + $0x528] sm:$0xff]
        %v944 = vld [vmem:[%s691 + $0x530] sm:$0xff]
        %v945 = vld [vmem:[%s691 + $0x538] sm:$0xff]
        %v946 = vld [vmem:[%s691 + $0x540] sm:$0xff]
        %v947 = vld [vmem:[%s691 + $0x548] sm:$0xff]
        %v948 = vld [vmem:[%s691 + $0x550] sm:$0xff]
        %v949 = vld [vmem:[%s691 + $0x558] sm:$0xff]
        %v950 = vld [vmem:[%s691 + $0x560] sm:$0xff]
        %v951 = vld [vmem:[%s691 + $0x568] sm:$0xff]
        %v952 = vld [vmem:[%s691 + $0x570] sm:$0xff]
        %v953 = vld [vmem:[%s691 + $0x578] sm:$0xff]
        %v954 = vld [vmem:[%s691 + $0x580] sm:$0xff]
        %v955 = vld [vmem:[%s691 + $0x588] sm:$0xff]
        %v956 = vld [vmem:[%s691 + $0x590] sm:$0xff]
        %v957 = vld [vmem:[%s691 + $0x598] sm:$0xff]
        %v958 = vld [vmem:[%s691 + $0x5a0] sm:$0xff]
        %v959 = vld [vmem:[%s691 + $0x5a8] sm:$0xff]
        %v960 = vld [vmem:[%s691 + $0x5b0] sm:$0xff]
        %v961 = vld [vmem:[%s691 + $0x5b8] sm:$0xff]
        %v962 = vld [vmem:[%s691 + $0x5c0] sm:$0xff]
        %v963 = vld [vmem:[%s691 + $0x5c8] sm:$0xff]
        %v964 = vld [vmem:[%s691 + $0x5d0] sm:$0xff]
        %v965 = vld [vmem:[%s691 + $0x5d8] sm:$0xff]
        %v966 = vld [vmem:[%s691 + $0x5e0] sm:$0xff]
        %v967 = vld [vmem:[%s691 + $0x5e8] sm:$0xff]
        %v968 = vld [vmem:[%s691 + $0x5f0] sm:$0xff]
        %v969 = vld [vmem:[%s691 + $0x5f8] sm:$0xff]
        %vm970 = vcmask 523264
        %v972 = vsel %vm970, %v767, 0
        %v975 = vsel %vm970, %v769, 0
        %v978 = vsel %vm970, %v771, 0
        %v981 = vsel %vm970, %v773, 0
        %v984 = vsel %vm970, %v775, 0
        %v987 = vsel %vm970, %v777, 0
        %989 = vmatpush.msra.mxu0 %v898
        %990 = vmatpush.msra.mxu0 %v890
        %991 = vmatpush.msra.mxu0 %v882
        %992 = vmatpush.msra.mxu0 %v874
        %993 = vmatpush.msra.mxu0 %v866
        %994 = vmatpush.msra.mxu0 %v858
        %995 = vmatpush.msra.mxu0 %v850
        %996 = vmatpush.msra.mxu0 %v842
        %997 = vmatpush.msra.mxu0 %v834
        %998 = vmatpush.msra.mxu0 %v826
        %999 = vmatpush.msra.mxu0 %v818
        %1000 = vmatpush.msra.mxu0 %v810
        %1001 = vmatpush.msra.mxu0 %v802
        %1002 = vmatpush.msra.mxu0 %v794
        %1003 = vmatpush.msra.mxu0 %v786
        %1004 = vmatpush.msra.mxu0 %v778
        %1005 = vmatmul.f32.gmra.mxu0 %v766
        %v1006 = vpop.f32.mrf.mxu0
        %v1007 = vadd.f32 0.0, %v1006
        %1008 = vmatmul.f32.gmra.mxu0 %v768
        %v1009 = vpop.f32.mrf.mxu0
        %v1010 = vadd.f32 0.0, %v1009
        %1011 = vmatmul.f32.gmra.mxu0 %v770
        %v1012 = vpop.f32.mrf.mxu0
        %v1013 = vadd.f32 0.0, %v1012
        %1014 = vmatmul.f32.gmra.mxu0 %v772
        %v1015 = vpop.f32.mrf.mxu0
        %v1016 = vadd.f32 0.0, %v1015
        %1017 = vmatmul.f32.gmra.mxu0 %v774
        %v1018 = vpop.f32.mrf.mxu0
        %v1019 = vadd.f32 0.0, %v1018
        %1020 = vmatmul.f32.gmra.mxu0 %v776
        %v1021 = vpop.f32.mrf.mxu0
        %v1022 = vadd.f32 0.0, %v1021
        %1023 = vdwg.mxu0
        %1024 = vmatpush.msra.mxu0 0.0
        %1025 = vmatpush.msra.mxu0 0.0
        %1026 = vmatpush.msra.mxu0 0.0
        %1027 = vmatpush.msra.mxu0 0.0
        %1028 = vmatpush.msra.mxu0 0.0
        %1029 = vmatpush.msra.mxu0 0.0
        %1030 = vmatpush.msra.mxu0 0.0
        %1031 = vmatpush.msra.mxu0 0.0
        %1032 = vmatpush.msra.mxu0 %v962
        %1033 = vmatpush.msra.mxu0 %v954
        %1034 = vmatpush.msra.mxu0 %v946
        %1035 = vmatpush.msra.mxu0 %v938
        %1036 = vmatpush.msra.mxu0 %v930
        %1037 = vmatpush.msra.mxu0 %v922
        %1038 = vmatpush.msra.mxu0 %v914
        %1039 = vmatpush.msra.mxu0 %v906
        %1040 = vmatmul.f32.gmra.mxu0 %v972
        %v1041 = vpop.f32.mrf.mxu0
        %v1042 = vadd.f32 %v1007, %v1041
        %1043 = vmatmul.f32.gmra.mxu0 %v975
        %v1044 = vpop.f32.mrf.mxu0
        %v1045 = vadd.f32 %v1010, %v1044
        %1046 = vmatmul.f32.gmra.mxu0 %v978
        %v1047 = vpop.f32.mrf.mxu0
        %v1048 = vadd.f32 %v1013, %v1047
        %1049 = vmatmul.f32.gmra.mxu0 %v981
        %v1050 = vpop.f32.mrf.mxu0
        %v1051 = vadd.f32 %v1016, %v1050
        %1052 = vmatmul.f32.gmra.mxu0 %v984
        %v1053 = vpop.f32.mrf.mxu0
        %v1054 = vadd.f32 %v1019, %v1053
        %1055 = vmatmul.f32.gmra.mxu0 %v987
        %v1056 = vpop.f32.mrf.mxu0
        %v1057 = vadd.f32 %v1022, %v1056
        %1058 = vdwg.mxu0
        %1059 = vmatpush.msra.mxu0 %v899
        %1060 = vmatpush.msra.mxu0 %v891
        %1061 = vmatpush.msra.mxu0 %v883
        %1062 = vmatpush.msra.mxu0 %v875
        %1063 = vmatpush.msra.mxu0 %v867
        %1064 = vmatpush.msra.mxu0 %v859
        %1065 = vmatpush.msra.mxu0 %v851
        %1066 = vmatpush.msra.mxu0 %v843
        %1067 = vmatpush.msra.mxu0 %v835
        %1068 = vmatpush.msra.mxu0 %v827
        %1069 = vmatpush.msra.mxu0 %v819
        %1070 = vmatpush.msra.mxu0 %v811
        %1071 = vmatpush.msra.mxu0 %v803
        %1072 = vmatpush.msra.mxu0 %v795
        %1073 = vmatpush.msra.mxu0 %v787
        %1074 = vmatpush.msra.mxu0 %v779
        %1075 = vmatmul.f32.gmra.mxu0 %v766
        %v1076 = vpop.f32.mrf.mxu0
        %v1077 = vadd.f32 0.0, %v1076
        %1078 = vmatmul.f32.gmra.mxu0 %v768
        %v1079 = vpop.f32.mrf.mxu0
        %v1080 = vadd.f32 0.0, %v1079
        %1081 = vmatmul.f32.gmra.mxu0 %v770
        %v1082 = vpop.f32.mrf.mxu0
        %v1083 = vadd.f32 0.0, %v1082
        %1084 = vmatmul.f32.gmra.mxu0 %v772
        %v1085 = vpop.f32.mrf.mxu0
        %v1086 = vadd.f32 0.0, %v1085
        %1087 = vmatmul.f32.gmra.mxu0 %v774
        %v1088 = vpop.f32.mrf.mxu0
        %v1089 = vadd.f32 0.0, %v1088
        %1090 = vmatmul.f32.gmra.mxu0 %v776
        %v1091 = vpop.f32.mrf.mxu0
        %v1092 = vadd.f32 0.0, %v1091
        %1093 = vdwg.mxu0
        %1094 = vmatpush.msra.mxu0 0.0
        %1095 = vmatpush.msra.mxu0 0.0
        %1096 = vmatpush.msra.mxu0 0.0
        %1097 = vmatpush.msra.mxu0 0.0
        %1098 = vmatpush.msra.mxu0 0.0
        %1099 = vmatpush.msra.mxu0 0.0
        %1100 = vmatpush.msra.mxu0 0.0
        %1101 = vmatpush.msra.mxu0 0.0
        %1102 = vmatpush.msra.mxu0 %v963
        %1103 = vmatpush.msra.mxu0 %v955
        %1104 = vmatpush.msra.mxu0 %v947
        %1105 = vmatpush.msra.mxu0 %v939
        %1106 = vmatpush.msra.mxu0 %v931
        %1107 = vmatpush.msra.mxu0 %v923
        %1108 = vmatpush.msra.mxu0 %v915
        %1109 = vmatpush.msra.mxu0 %v907
        %1110 = vmatmul.f32.gmra.mxu0 %v972
        %v1111 = vpop.f32.mrf.mxu0
        %v1112 = vadd.f32 %v1077, %v1111
        %1113 = vmatmul.f32.gmra.mxu0 %v975
        %v1114 = vpop.f32.mrf.mxu0
        %v1115 = vadd.f32 %v1080, %v1114
        %1116 = vmatmul.f32.gmra.mxu0 %v978
        %v1117 = vpop.f32.mrf.mxu0
        %v1118 = vadd.f32 %v1083, %v1117
        %1119 = vmatmul.f32.gmra.mxu0 %v981
        %v1120 = vpop.f32.mrf.mxu0
        %v1121 = vadd.f32 %v1086, %v1120
        %1122 = vmatmul.f32.gmra.mxu0 %v984
        %v1123 = vpop.f32.mrf.mxu0
        %v1124 = vadd.f32 %v1089, %v1123
        %1125 = vmatmul.f32.gmra.mxu0 %v987
        %v1126 = vpop.f32.mrf.mxu0
        %v1127 = vadd.f32 %v1092, %v1126
        %1128 = vdwg.mxu0
        %1129 = vmatpush.msra.mxu0 %v900
        %1130 = vmatpush.msra.mxu0 %v892
        %1131 = vmatpush.msra.mxu0 %v884
        %1132 = vmatpush.msra.mxu0 %v876
        %1133 = vmatpush.msra.mxu0 %v868
        %1134 = vmatpush.msra.mxu0 %v860
        %1135 = vmatpush.msra.mxu0 %v852
        %1136 = vmatpush.msra.mxu0 %v844
        %1137 = vmatpush.msra.mxu0 %v836
        %1138 = vmatpush.msra.mxu0 %v828
        %1139 = vmatpush.msra.mxu0 %v820
        %1140 = vmatpush.msra.mxu0 %v812
        %1141 = vmatpush.msra.mxu0 %v804
        %1142 = vmatpush.msra.mxu0 %v796
        %1143 = vmatpush.msra.mxu0 %v788
        %1144 = vmatpush.msra.mxu0 %v780
        %1145 = vmatmul.f32.gmra.mxu0 %v766
        %v1146 = vpop.f32.mrf.mxu0
        %v1147 = vadd.f32 0.0, %v1146
        %1148 = vmatmul.f32.gmra.mxu0 %v768
        %v1149 = vpop.f32.mrf.mxu0
        %v1150 = vadd.f32 0.0, %v1149
        %1151 = vmatmul.f32.gmra.mxu0 %v770
        %v1152 = vpop.f32.mrf.mxu0
        %v1153 = vadd.f32 0.0, %v1152
        %1154 = vmatmul.f32.gmra.mxu0 %v772
        %v1155 = vpop.f32.mrf.mxu0
        %v1156 = vadd.f32 0.0, %v1155
        %1157 = vmatmul.f32.gmra.mxu0 %v774
        %v1158 = vpop.f32.mrf.mxu0
        %v1159 = vadd.f32 0.0, %v1158
        %1160 = vmatmul.f32.gmra.mxu0 %v776
        %v1161 = vpop.f32.mrf.mxu0
        %v1162 = vadd.f32 0.0, %v1161
        %1163 = vdwg.mxu0
        %1164 = vmatpush.msra.mxu0 0.0
        %1165 = vmatpush.msra.mxu0 0.0
        %1166 = vmatpush.msra.mxu0 0.0
        %1167 = vmatpush.msra.mxu0 0.0
        %1168 = vmatpush.msra.mxu0 0.0
        %1169 = vmatpush.msra.mxu0 0.0
        %1170 = vmatpush.msra.mxu0 0.0
        %1171 = vmatpush.msra.mxu0 0.0
        %1172 = vmatpush.msra.mxu0 %v964
        %1173 = vmatpush.msra.mxu0 %v956
        %1174 = vmatpush.msra.mxu0 %v948
        %1175 = vmatpush.msra.mxu0 %v940
        %1176 = vmatpush.msra.mxu0 %v932
        %1177 = vmatpush.msra.mxu0 %v924
        %1178 = vmatpush.msra.mxu0 %v916
        %1179 = vmatpush.msra.mxu0 %v908
        %1180 = vmatmul.f32.gmra.mxu0 %v972
        %v1181 = vpop.f32.mrf.mxu0
        %v1182 = vadd.f32 %v1147, %v1181
        %1183 = vmatmul.f32.gmra.mxu0 %v975
        %v1184 = vpop.f32.mrf.mxu0
        %v1185 = vadd.f32 %v1150, %v1184
        %1186 = vmatmul.f32.gmra.mxu0 %v978
        %v1187 = vpop.f32.mrf.mxu0
        %v1188 = vadd.f32 %v1153, %v1187
        %1189 = vmatmul.f32.gmra.mxu0 %v981
        %v1190 = vpop.f32.mrf.mxu0
        %v1191 = vadd.f32 %v1156, %v1190
        %1192 = vmatmul.f32.gmra.mxu0 %v984
        %v1193 = vpop.f32.mrf.mxu0
        %v1194 = vadd.f32 %v1159, %v1193
        %1195 = vmatmul.f32.gmra.mxu0 %v987
        %v1196 = vpop.f32.mrf.mxu0
        %v1197 = vadd.f32 %v1162, %v1196
        %1198 = vdwg.mxu0
        %1199 = vmatpush.msra.mxu0 %v901
        %1200 = vmatpush.msra.mxu0 %v893
        %1201 = vmatpush.msra.mxu0 %v885
        %1202 = vmatpush.msra.mxu0 %v877
        %1203 = vmatpush.msra.mxu0 %v869
        %1204 = vmatpush.msra.mxu0 %v861
        %1205 = vmatpush.msra.mxu0 %v853
        %1206 = vmatpush.msra.mxu0 %v845
        %1207 = vmatpush.msra.mxu0 %v837
        %1208 = vmatpush.msra.mxu0 %v829
        %1209 = vmatpush.msra.mxu0 %v821
        %1210 = vmatpush.msra.mxu0 %v813
        %1211 = vmatpush.msra.mxu0 %v805
        %1212 = vmatpush.msra.mxu0 %v797
        %1213 = vmatpush.msra.mxu0 %v789
        %1214 = vmatpush.msra.mxu0 %v781
        %1215 = vmatmul.f32.gmra.mxu0 %v766
        %v1216 = vpop.f32.mrf.mxu0
        %v1217 = vadd.f32 0.0, %v1216
        %1218 = vmatmul.f32.gmra.mxu0 %v768
        %v1219 = vpop.f32.mrf.mxu0
        %v1220 = vadd.f32 0.0, %v1219
        %1221 = vmatmul.f32.gmra.mxu0 %v770
        %v1222 = vpop.f32.mrf.mxu0
        %v1223 = vadd.f32 0.0, %v1222
        %1224 = vmatmul.f32.gmra.mxu0 %v772
        %v1225 = vpop.f32.mrf.mxu0
        %v1226 = vadd.f32 0.0, %v1225
        %1227 = vmatmul.f32.gmra.mxu0 %v774
        %v1228 = vpop.f32.mrf.mxu0
        %v1229 = vadd.f32 0.0, %v1228
        %1230 = vmatmul.f32.gmra.mxu0 %v776
        %v1231 = vpop.f32.mrf.mxu0
        %v1232 = vadd.f32 0.0, %v1231
        %1233 = vdwg.mxu0
        %1234 = vmatpush.msra.mxu0 0.0
        %1235 = vmatpush.msra.mxu0 0.0
        %1236 = vmatpush.msra.mxu0 0.0
        %1237 = vmatpush.msra.mxu0 0.0
        %1238 = vmatpush.msra.mxu0 0.0
        %1239 = vmatpush.msra.mxu0 0.0
        %1240 = vmatpush.msra.mxu0 0.0
        %1241 = vmatpush.msra.mxu0 0.0
        %1242 = vmatpush.msra.mxu0 %v965
        %1243 = vmatpush.msra.mxu0 %v957
        %1244 = vmatpush.msra.mxu0 %v949
        %1245 = vmatpush.msra.mxu0 %v941
        %1246 = vmatpush.msra.mxu0 %v933
        %1247 = vmatpush.msra.mxu0 %v925
        %1248 = vmatpush.msra.mxu0 %v917
        %1249 = vmatpush.msra.mxu0 %v909
        %1250 = vmatmul.f32.gmra.mxu0 %v972
        %v1251 = vpop.f32.mrf.mxu0
        %v1252 = vadd.f32 %v1217, %v1251
        %1253 = vmatmul.f32.gmra.mxu0 %v975
        %v1254 = vpop.f32.mrf.mxu0
        %v1255 = vadd.f32 %v1220, %v1254
        %1256 = vmatmul.f32.gmra.mxu0 %v978
        %v1257 = vpop.f32.mrf.mxu0
        %v1258 = vadd.f32 %v1223, %v1257
        %1259 = vmatmul.f32.gmra.mxu0 %v981
        %v1260 = vpop.f32.mrf.mxu0
        %v1261 = vadd.f32 %v1226, %v1260
        %1262 = vmatmul.f32.gmra.mxu0 %v984
        %v1263 = vpop.f32.mrf.mxu0
        %v1264 = vadd.f32 %v1229, %v1263
        %1265 = vmatmul.f32.gmra.mxu0 %v987
        %v1266 = vpop.f32.mrf.mxu0
        %v1267 = vadd.f32 %v1232, %v1266
        %1268 = vdwg.mxu0
        %1269 = vmatpush.msra.mxu0 %v902
        %1270 = vmatpush.msra.mxu0 %v894
        %1271 = vmatpush.msra.mxu0 %v886
        %1272 = vmatpush.msra.mxu0 %v878
        %1273 = vmatpush.msra.mxu0 %v870
        %1274 = vmatpush.msra.mxu0 %v862
        %1275 = vmatpush.msra.mxu0 %v854
        %1276 = vmatpush.msra.mxu0 %v846
        %1277 = vmatpush.msra.mxu0 %v838
        %1278 = vmatpush.msra.mxu0 %v830
        %1279 = vmatpush.msra.mxu0 %v822
        %1280 = vmatpush.msra.mxu0 %v814
        %1281 = vmatpush.msra.mxu0 %v806
        %1282 = vmatpush.msra.mxu0 %v798
        %1283 = vmatpush.msra.mxu0 %v790
        %1284 = vmatpush.msra.mxu0 %v782
        %1285 = vmatmul.f32.gmra.mxu0 %v766
        %v1286 = vpop.f32.mrf.mxu0
        %v1287 = vadd.f32 0.0, %v1286
        %1288 = vmatmul.f32.gmra.mxu0 %v768
        %v1289 = vpop.f32.mrf.mxu0
        %v1290 = vadd.f32 0.0, %v1289
        %1291 = vmatmul.f32.gmra.mxu0 %v770
        %v1292 = vpop.f32.mrf.mxu0
        %v1293 = vadd.f32 0.0, %v1292
        %1294 = vmatmul.f32.gmra.mxu0 %v772
        %v1295 = vpop.f32.mrf.mxu0
        %v1296 = vadd.f32 0.0, %v1295
        %1297 = vmatmul.f32.gmra.mxu0 %v774
        %v1298 = vpop.f32.mrf.mxu0
        %v1299 = vadd.f32 0.0, %v1298
        %1300 = vmatmul.f32.gmra.mxu0 %v776
        %v1301 = vpop.f32.mrf.mxu0
        %v1302 = vadd.f32 0.0, %v1301
        %1303 = vdwg.mxu0
        %1304 = vmatpush.msra.mxu0 0.0
        %1305 = vmatpush.msra.mxu0 0.0
        %1306 = vmatpush.msra.mxu0 0.0
        %1307 = vmatpush.msra.mxu0 0.0
        %1308 = vmatpush.msra.mxu0 0.0
        %1309 = vmatpush.msra.mxu0 0.0
        %1310 = vmatpush.msra.mxu0 0.0
        %1311 = vmatpush.msra.mxu0 0.0
        %1312 = vmatpush.msra.mxu0 %v966
        %1313 = vmatpush.msra.mxu0 %v958
        %1314 = vmatpush.msra.mxu0 %v950
        %1315 = vmatpush.msra.mxu0 %v942
        %1316 = vmatpush.msra.mxu0 %v934
        %1317 = vmatpush.msra.mxu0 %v926
        %1318 = vmatpush.msra.mxu0 %v918
        %1319 = vmatpush.msra.mxu0 %v910
        %1320 = vmatmul.f32.gmra.mxu0 %v972
        %v1321 = vpop.f32.mrf.mxu0
        %v1322 = vadd.f32 %v1287, %v1321
        %1323 = vmatmul.f32.gmra.mxu0 %v975
        %v1324 = vpop.f32.mrf.mxu0
        %v1325 = vadd.f32 %v1290, %v1324
        %1326 = vmatmul.f32.gmra.mxu0 %v978
        %v1327 = vpop.f32.mrf.mxu0
        %v1328 = vadd.f32 %v1293, %v1327
        %1329 = vmatmul.f32.gmra.mxu0 %v981
        %v1330 = vpop.f32.mrf.mxu0
        %v1331 = vadd.f32 %v1296, %v1330
        %1332 = vmatmul.f32.gmra.mxu0 %v984
        %v1333 = vpop.f32.mrf.mxu0
        %v1334 = vadd.f32 %v1299, %v1333
        %1335 = vmatmul.f32.gmra.mxu0 %v987
        %v1336 = vpop.f32.mrf.mxu0
        %v1337 = vadd.f32 %v1302, %v1336
        %1338 = vdwg.mxu0
        %1339 = vmatpush.msra.mxu0 %v903
        %1340 = vmatpush.msra.mxu0 %v895
        %1341 = vmatpush.msra.mxu0 %v887
        %1342 = vmatpush.msra.mxu0 %v879
        %1343 = vmatpush.msra.mxu0 %v871
        %1344 = vmatpush.msra.mxu0 %v863
        %1345 = vmatpush.msra.mxu0 %v855
        %1346 = vmatpush.msra.mxu0 %v847
        %1347 = vmatpush.msra.mxu0 %v839
        %1348 = vmatpush.msra.mxu0 %v831
        %1349 = vmatpush.msra.mxu0 %v823
        %1350 = vmatpush.msra.mxu0 %v815
        %1351 = vmatpush.msra.mxu0 %v807
        %1352 = vmatpush.msra.mxu0 %v799
        %1353 = vmatpush.msra.mxu0 %v791
        %1354 = vmatpush.msra.mxu0 %v783
        %1355 = vmatmul.f32.gmra.mxu0 %v766
        %v1356 = vpop.f32.mrf.mxu0
        %v1357 = vadd.f32 0.0, %v1356
        %1358 = vmatmul.f32.gmra.mxu0 %v768
        %v1359 = vpop.f32.mrf.mxu0
        %v1360 = vadd.f32 0.0, %v1359
        %1361 = vmatmul.f32.gmra.mxu0 %v770
        %v1362 = vpop.f32.mrf.mxu0
        %v1363 = vadd.f32 0.0, %v1362
        %1364 = vmatmul.f32.gmra.mxu0 %v772
        %v1365 = vpop.f32.mrf.mxu0
        %v1366 = vadd.f32 0.0, %v1365
        %1367 = vmatmul.f32.gmra.mxu0 %v774
        %v1368 = vpop.f32.mrf.mxu0
        %v1369 = vadd.f32 0.0, %v1368
        %1370 = vmatmul.f32.gmra.mxu0 %v776
        %v1371 = vpop.f32.mrf.mxu0
        %v1372 = vadd.f32 0.0, %v1371
        %1373 = vdwg.mxu0
        %1374 = vmatpush.msra.mxu0 0.0
        %1375 = vmatpush.msra.mxu0 0.0
        %1376 = vmatpush.msra.mxu0 0.0
        %1377 = vmatpush.msra.mxu0 0.0
        %1378 = vmatpush.msra.mxu0 0.0
        %1379 = vmatpush.msra.mxu0 0.0
        %1380 = vmatpush.msra.mxu0 0.0
        %1381 = vmatpush.msra.mxu0 0.0
        %1382 = vmatpush.msra.mxu0 %v967
        %1383 = vmatpush.msra.mxu0 %v959
        %1384 = vmatpush.msra.mxu0 %v951
        %1385 = vmatpush.msra.mxu0 %v943
        %1386 = vmatpush.msra.mxu0 %v935
        %1387 = vmatpush.msra.mxu0 %v927
        %1388 = vmatpush.msra.mxu0 %v919
        %1389 = vmatpush.msra.mxu0 %v911
        %1390 = vmatmul.f32.gmra.mxu0 %v972
        %v1391 = vpop.f32.mrf.mxu0
        %v1392 = vadd.f32 %v1357, %v1391
        %1393 = vmatmul.f32.gmra.mxu0 %v975
        %v1394 = vpop.f32.mrf.mxu0
        %v1395 = vadd.f32 %v1360, %v1394
        %1396 = vmatmul.f32.gmra.mxu0 %v978
        %v1397 = vpop.f32.mrf.mxu0
        %v1398 = vadd.f32 %v1363, %v1397
        %1399 = vmatmul.f32.gmra.mxu0 %v981
        %v1400 = vpop.f32.mrf.mxu0
        %v1401 = vadd.f32 %v1366, %v1400
        %1402 = vmatmul.f32.gmra.mxu0 %v984
        %v1403 = vpop.f32.mrf.mxu0
        %v1404 = vadd.f32 %v1369, %v1403
        %1405 = vmatmul.f32.gmra.mxu0 %v987
        %v1406 = vpop.f32.mrf.mxu0
        %v1407 = vadd.f32 %v1372, %v1406
        %1408 = vdwg.mxu0
        %1409 = vmatpush.msra.mxu0 %v904
        %1410 = vmatpush.msra.mxu0 %v896
        %1411 = vmatpush.msra.mxu0 %v888
        %1412 = vmatpush.msra.mxu0 %v880
        %1413 = vmatpush.msra.mxu0 %v872
        %1414 = vmatpush.msra.mxu0 %v864
        %1415 = vmatpush.msra.mxu0 %v856
        %1416 = vmatpush.msra.mxu0 %v848
        %1417 = vmatpush.msra.mxu0 %v840
        %1418 = vmatpush.msra.mxu0 %v832
        %1419 = vmatpush.msra.mxu0 %v824
        %1420 = vmatpush.msra.mxu0 %v816
        %1421 = vmatpush.msra.mxu0 %v808
        %1422 = vmatpush.msra.mxu0 %v800
        %1423 = vmatpush.msra.mxu0 %v792
        %1424 = vmatpush.msra.mxu0 %v784
        %1425 = vmatmul.f32.gmra.mxu0 %v766
        %v1426 = vpop.f32.mrf.mxu0
        %v1427 = vadd.f32 0.0, %v1426
        %1428 = vmatmul.f32.gmra.mxu0 %v768
        %v1429 = vpop.f32.mrf.mxu0
        %v1430 = vadd.f32 0.0, %v1429
        %1431 = vmatmul.f32.gmra.mxu0 %v770
        %v1432 = vpop.f32.mrf.mxu0
        %v1433 = vadd.f32 0.0, %v1432
        %1434 = vmatmul.f32.gmra.mxu0 %v772
        %v1435 = vpop.f32.mrf.mxu0
        %v1436 = vadd.f32 0.0, %v1435
        %1437 = vmatmul.f32.gmra.mxu0 %v774
        %v1438 = vpop.f32.mrf.mxu0
        %v1439 = vadd.f32 0.0, %v1438
        %1440 = vmatmul.f32.gmra.mxu0 %v776
        %v1441 = vpop.f32.mrf.mxu0
        %v1442 = vadd.f32 0.0, %v1441
        %1443 = vdwg.mxu0
        %1444 = vmatpush.msra.mxu0 0.0
        %1445 = vmatpush.msra.mxu0 0.0
        %1446 = vmatpush.msra.mxu0 0.0
        %1447 = vmatpush.msra.mxu0 0.0
        %1448 = vmatpush.msra.mxu0 0.0
        %1449 = vmatpush.msra.mxu0 0.0
        %1450 = vmatpush.msra.mxu0 0.0
        %1451 = vmatpush.msra.mxu0 0.0
        %1452 = vmatpush.msra.mxu0 %v968
        %1453 = vmatpush.msra.mxu0 %v960
        %1454 = vmatpush.msra.mxu0 %v952
        %1455 = vmatpush.msra.mxu0 %v944
        %1456 = vmatpush.msra.mxu0 %v936
        %1457 = vmatpush.msra.mxu0 %v928
        %1458 = vmatpush.msra.mxu0 %v920
        %1459 = vmatpush.msra.mxu0 %v912
        %1460 = vmatmul.f32.gmra.mxu0 %v972
        %v1461 = vpop.f32.mrf.mxu0
        %v1462 = vadd.f32 %v1427, %v1461
        %1463 = vmatmul.f32.gmra.mxu0 %v975
        %v1464 = vpop.f32.mrf.mxu0
        %v1465 = vadd.f32 %v1430, %v1464
        %1466 = vmatmul.f32.gmra.mxu0 %v978
        %v1467 = vpop.f32.mrf.mxu0
        %v1468 = vadd.f32 %v1433, %v1467
        %1469 = vmatmul.f32.gmra.mxu0 %v981
        %v1470 = vpop.f32.mrf.mxu0
        %v1471 = vadd.f32 %v1436, %v1470
        %1472 = vmatmul.f32.gmra.mxu0 %v984
        %v1473 = vpop.f32.mrf.mxu0
        %v1474 = vadd.f32 %v1439, %v1473
        %1475 = vmatmul.f32.gmra.mxu0 %v987
        %v1476 = vpop.f32.mrf.mxu0
        %v1477 = vadd.f32 %v1442, %v1476
        %1478 = vdwg.mxu0
        %1479 = vmatpush.msra.mxu0 %v905
        %1480 = vmatpush.msra.mxu0 %v897
        %1481 = vmatpush.msra.mxu0 %v889
        %1482 = vmatpush.msra.mxu0 %v881
        %1483 = vmatpush.msra.mxu0 %v873
        %1484 = vmatpush.msra.mxu0 %v865
        %1485 = vmatpush.msra.mxu0 %v857
        %1486 = vmatpush.msra.mxu0 %v849
        %1487 = vmatpush.msra.mxu0 %v841
        %1488 = vmatpush.msra.mxu0 %v833
        %1489 = vmatpush.msra.mxu0 %v825
        %1490 = vmatpush.msra.mxu0 %v817
        %1491 = vmatpush.msra.mxu0 %v809
        %1492 = vmatpush.msra.mxu0 %v801
        %1493 = vmatpush.msra.mxu0 %v793
        %1494 = vmatpush.msra.mxu0 %v785
        %1495 = vmatmul.f32.gmra.mxu0 %v766
        %v1496 = vpop.f32.mrf.mxu0
        %v1497 = vadd.f32 0.0, %v1496
        %1498 = vmatmul.f32.gmra.mxu0 %v768
        %v1499 = vpop.f32.mrf.mxu0
        %v1500 = vadd.f32 0.0, %v1499
        %1501 = vmatmul.f32.gmra.mxu0 %v770
        %v1502 = vpop.f32.mrf.mxu0
        %v1503 = vadd.f32 0.0, %v1502
        %1504 = vmatmul.f32.gmra.mxu0 %v772
        %v1505 = vpop.f32.mrf.mxu0
        %v1506 = vadd.f32 0.0, %v1505
        %1507 = vmatmul.f32.gmra.mxu0 %v774
        %v1508 = vpop.f32.mrf.mxu0
        %v1509 = vadd.f32 0.0, %v1508
        %1510 = vmatmul.f32.gmra.mxu0 %v776
        %v1511 = vpop.f32.mrf.mxu0
        %v1512 = vadd.f32 0.0, %v1511
        %1513 = vdwg.mxu0
        %1514 = vmatpush.msra.mxu0 0.0
        %1515 = vmatpush.msra.mxu0 0.0
        %1516 = vmatpush.msra.mxu0 0.0
        %1517 = vmatpush.msra.mxu0 0.0
        %1518 = vmatpush.msra.mxu0 0.0
        %1519 = vmatpush.msra.mxu0 0.0
        %1520 = vmatpush.msra.mxu0 0.0
        %1521 = vmatpush.msra.mxu0 0.0
        %1522 = vmatpush.msra.mxu0 %v969
        %1523 = vmatpush.msra.mxu0 %v961
        %1524 = vmatpush.msra.mxu0 %v953
        %1525 = vmatpush.msra.mxu0 %v945
        %1526 = vmatpush.msra.mxu0 %v937
        %1527 = vmatpush.msra.mxu0 %v929
        %1528 = vmatpush.msra.mxu0 %v921
        %1529 = vmatpush.msra.mxu0 %v913
        %1530 = vmatmul.f32.gmra.mxu0 %v972
        %v1531 = vpop.f32.mrf.mxu0
        %v1532 = vadd.f32 %v1497, %v1531
        %1533 = vmatmul.f32.gmra.mxu0 %v975
        %v1534 = vpop.f32.mrf.mxu0
        %v1535 = vadd.f32 %v1500, %v1534
        %1536 = vmatmul.f32.gmra.mxu0 %v978
        %v1537 = vpop.f32.mrf.mxu0
        %v1538 = vadd.f32 %v1503, %v1537
        %1539 = vmatmul.f32.gmra.mxu0 %v981
        %v1540 = vpop.f32.mrf.mxu0
        %v1541 = vadd.f32 %v1506, %v1540
        %1542 = vmatmul.f32.gmra.mxu0 %v984
        %v1543 = vpop.f32.mrf.mxu0
        %v1544 = vadd.f32 %v1509, %v1543
        %1545 = vmatmul.f32.gmra.mxu0 %v987
        %v1546 = vpop.f32.mrf.mxu0
        %v1547 = vadd.f32 %v1512, %v1546
        %1548 = vdwg.mxu0
        %1549 = vst [vmem:[%s714] sm:$0xff] %v1042
        %1550 = vst [vmem:[%s714 + $0x8] sm:$0xff] %v1112
        %1551 = vst [vmem:[%s714 + $0x10] sm:$0xff] %v1182
        %1552 = vst [vmem:[%s714 + $0x18] sm:$0xff] %v1252
        %1553 = vst [vmem:[%s714 + $0x20] sm:$0xff] %v1322
        %1554 = vst [vmem:[%s714 + $0x28] sm:$0xff] %v1392
        %1555 = vst [vmem:[%s714 + $0x30] sm:$0xff] %v1462
        %1556 = vst [vmem:[%s714 + $0x38] sm:$0xff] %v1532
        %1557 = vst [vmem:[%s714 + $0x40] sm:$0xff] %v1045
        %1558 = vst [vmem:[%s714 + $0x48] sm:$0xff] %v1115
        %1559 = vst [vmem:[%s714 + $0x50] sm:$0xff] %v1185
        %1560 = vst [vmem:[%s714 + $0x58] sm:$0xff] %v1255
        %1561 = vst [vmem:[%s714 + $0x60] sm:$0xff] %v1325
        %1562 = vst [vmem:[%s714 + $0x68] sm:$0xff] %v1395
        %1563 = vst [vmem:[%s714 + $0x70] sm:$0xff] %v1465
        %1564 = vst [vmem:[%s714 + $0x78] sm:$0xff] %v1535
        %1565 = vst [vmem:[%s714 + $0x80] sm:$0xff] %v1048
        %1566 = vst [vmem:[%s714 + $0x88] sm:$0xff] %v1118
        %1567 = vst [vmem:[%s714 + $0x90] sm:$0xff] %v1188
        %1568 = vst [vmem:[%s714 + $0x98] sm:$0xff] %v1258
        %1569 = vst [vmem:[%s714 + $0xa0] sm:$0xff] %v1328
        %1570 = vst [vmem:[%s714 + $0xa8] sm:$0xff] %v1398
        %1571 = vst [vmem:[%s714 + $0xb0] sm:$0xff] %v1468
        %1572 = vst [vmem:[%s714 + $0xb8] sm:$0xff] %v1538
        %1573 = vst [vmem:[%s714 + $0xc0] sm:$0xff] %v1051
        %1574 = vst [vmem:[%s714 + $0xc8] sm:$0xff] %v1121
        %1575 = vst [vmem:[%s714 + $0xd0] sm:$0xff] %v1191
        %1576 = vst [vmem:[%s714 + $0xd8] sm:$0xff] %v1261
        %1577 = vst [vmem:[%s714 + $0xe0] sm:$0xff] %v1331
        %1578 = vst [vmem:[%s714 + $0xe8] sm:$0xff] %v1401
        %1579 = vst [vmem:[%s714 + $0xf0] sm:$0xff] %v1471
        %1580 = vst [vmem:[%s714 + $0xf8] sm:$0xff] %v1541
        %1581 = vst [vmem:[%s714 + $0x100] sm:$0xff] %v1054
        %1582 = vst [vmem:[%s714 + $0x108] sm:$0xff] %v1124
        %1583 = vst [vmem:[%s714 + $0x110] sm:$0xff] %v1194
        %1584 = vst [vmem:[%s714 + $0x118] sm:$0xff] %v1264
        %1585 = vst [vmem:[%s714 + $0x120] sm:$0xff] %v1334
        %1586 = vst [vmem:[%s714 + $0x128] sm:$0xff] %v1404
        %1587 = vst [vmem:[%s714 + $0x130] sm:$0xff] %v1474
        %1588 = vst [vmem:[%s714 + $0x138] sm:$0xff] %v1544
        %1589 = vst [vmem:[%s714 + $0x140] sm:$0xff] %v1057
        %1590 = vst [vmem:[%s714 + $0x148] sm:$0xff] %v1127
        %1591 = vst [vmem:[%s714 + $0x150] sm:$0xff] %v1197
        %1592 = vst [vmem:[%s714 + $0x158] sm:$0xff] %v1267
        %1593 = vst [vmem:[%s714 + $0x160] sm:$0xff] %v1337
        %1594 = vst [vmem:[%s714 + $0x168] sm:$0xff] %v1407
        %1595 = vst [vmem:[%s714 + $0x170] sm:$0xff] %v1477
        %1596 = vst [vmem:[%s714 + $0x178] sm:$0xff] %v1547
        %s1597 = sand.u32 %s111, 1
        %s1598 = sand.u32 %s111, 1
        %s1599 = smul.addr %s1598, 384
        %s1600 = scalar_lea.vmem [#allocation3], %s1599
        // Predicated region
        $region99: #{se_mul_conv1x1.1} parent=93 // pred_check
          %p1601 = pneg %p121
        $region100: #{se_mul_conv1x1.1} parent=93 // pred_check_branch
          %1603 = sbr.rel (%p1601) target = $region102
        $region101: #{se_mul_conv1x1.1} parent=93 // pred_region
          %s1604 = smul.u32 8, %s19
          %s1605 = ssub.s32 25, %s1604
          %p1606 = scmp.lt.s32.totalorder %s1605, 8
          %s1607 = scalar_select %p1606, %s1605, 8
          %s1608 = smul.u32 48, %s1607
          %p1609 = scmp.ne.s32.totalorder 0, %s1608
          %s1610 = smul.addr %s18, 150
          %s1611 = sadd.s32 %s1604, %s1610
          %s1612 = smul.addr %s1611, 8
          %s1613 = scalar_lea.vmem %s3, %s1612
          %s1614 = smul.u32 %s1607, 8
          // Predicated region
          $region103: #{se_mul_conv1x1.1} parent=101 // pred_check
            %p1615 = pneg %p1609
          $region104: #{se_mul_conv1x1.1} parent=101 // pred_check_branch
            %1617 = sbr.rel (%p1615) target = $region106
          $region105: #{se_mul_conv1x1.1} parent=101 // pred_region
            %p1618 = scmp.lt.u32.totalorder %s1614, 8
            %p1619 = pneg %p1618
            // Predicated region
            $region107: #{se_mul_conv1x1.1} parent=105 // pred_check
              _
            $region108: #{se_mul_conv1x1.1} parent=105 // pred_check_branch
              %1621 = sbr.rel (%p1618) target = $region110
            $region109: #{se_mul_conv1x1.1} parent=105 // pred_region
              %s1647 = sand.u32 %s1614, 7
              %p1648 = scmp.eq.s32.totalorder %s1647, 0
              // Predicated region
              $region122: #{se_mul_conv1x1.1} parent=109 // pred_check
                %p1649 = pneg %p1648
              $region123: #{se_mul_conv1x1.1} parent=109 // pred_check_branch
                %1651 = sbr.rel (%p1649) target = $region125
              $region124: #{se_mul_conv1x1.1} parent=109 // pred_region
                %s1652 = sshrl.u32 %s1614, 3
                %s1653 = sdiv.u32.pop %s1652, 6
                %s1654 = srem.u32.pop %s1652, 6
                // While loop
                $region126: #{se_mul_conv1x1.1} parent=124 // loop_pre_header
                  _
                $region127: #{se_mul_conv1x1.1} parent=124 // loop_header
                  %s1656 = sphi 0, %s1658
                  %p1657 = scmp.ge.s32.totalorder %s1656, %s1653
                  %s1661 = sphi 0, %s1738
                  %s1662 = sphi %s1600, %s1741
                  %s1663 = sphi %s1613, %s1742
                $region128: #{se_mul_conv1x1.1} parent=124 // loop_header_branch
                  %1660 = sbr.rel (%p1657) target = $region132
                $region129: #{se_mul_conv1x1.1} parent=124 // loop_body
                  %v1664 = vld [vmem:[%s1662] sm:$0xff]
                  %1665 = vst [vmem:[%s1663] sm:$0xff] %v1664
                  %v1666 = vld [vmem:[%s1662 + $0x8] sm:$0xff]
                  %1667 = vst [vmem:[%s1663 + $0x8] sm:$0xff] %v1666
                  %v1668 = vld [vmem:[%s1662 + $0x10] sm:$0xff]
                  %1669 = vst [vmem:[%s1663 + $0x10] sm:$0xff] %v1668
                  %v1670 = vld [vmem:[%s1662 + $0x18] sm:$0xff]
                  %1671 = vst [vmem:[%s1663 + $0x18] sm:$0xff] %v1670
                  %v1672 = vld [vmem:[%s1662 + $0x20] sm:$0xff]
                  %1673 = vst [vmem:[%s1663 + $0x20] sm:$0xff] %v1672
                  %v1674 = vld [vmem:[%s1662 + $0x28] sm:$0xff]
                  %1675 = vst [vmem:[%s1663 + $0x28] sm:$0xff] %v1674
                  %v1676 = vld [vmem:[%s1662 + $0x40] sm:$0xff]
                  %1677 = vst [vmem:[%s1663 + $0xc8] sm:$0xff] %v1676
                  %v1678 = vld [vmem:[%s1662 + $0x48] sm:$0xff]
                  %1679 = vst [vmem:[%s1663 + $0xd0] sm:$0xff] %v1678
                  %v1680 = vld [vmem:[%s1662 + $0x50] sm:$0xff]
                  %1681 = vst [vmem:[%s1663 + $0xd8] sm:$0xff] %v1680
                  %v1682 = vld [vmem:[%s1662 + $0x58] sm:$0xff]
                  %1683 = vst [vmem:[%s1663 + $0xe0] sm:$0xff] %v1682
                  %v1684 = vld [vmem:[%s1662 + $0x60] sm:$0xff]
                  %1685 = vst [vmem:[%s1663 + $0xe8] sm:$0xff] %v1684
                  %v1686 = vld [vmem:[%s1662 + $0x68] sm:$0xff]
                  %1687 = vst [vmem:[%s1663 + $0xf0] sm:$0xff] %v1686
                  %v1688 = vld [vmem:[%s1662 + $0x80] sm:$0xff]
                  %1689 = vst [vmem:[%s1663 + $0x190] sm:$0xff] %v1688
                  %v1690 = vld [vmem:[%s1662 + $0x88] sm:$0xff]
                  %1691 = vst [vmem:[%s1663 + $0x198] sm:$0xff] %v1690
                  %v1692 = vld [vmem:[%s1662 + $0x90] sm:$0xff]
                  %1693 = vst [vmem:[%s1663 + $0x1a0] sm:$0xff] %v1692
                  %v1694 = vld [vmem:[%s1662 + $0x98] sm:$0xff]
                  %1695 = vst [vmem:[%s1663 + $0x1a8] sm:$0xff] %v1694
                  %v1696 = vld [vmem:[%s1662 + $0xa0] sm:$0xff]
                  %1697 = vst [vmem:[%s1663 + $0x1b0] sm:$0xff] %v1696
                  %v1698 = vld [vmem:[%s1662 + $0xa8] sm:$0xff]
                  %1699 = vst [vmem:[%s1663 + $0x1b8] sm:$0xff] %v1698
                  %v1700 = vld [vmem:[%s1662 + $0xc0] sm:$0xff]
                  %1701 = vst [vmem:[%s1663 + $0x258] sm:$0xff] %v1700
                  %v1702 = vld [vmem:[%s1662 + $0xc8] sm:$0xff]
                  %1703 = vst [vmem:[%s1663 + $0x260] sm:$0xff] %v1702
                  %v1704 = vld [vmem:[%s1662 + $0xd0] sm:$0xff]
                  %1705 = vst [vmem:[%s1663 + $0x268] sm:$0xff] %v1704
                  %v1706 = vld [vmem:[%s1662 + $0xd8] sm:$0xff]
                  %1707 = vst [vmem:[%s1663 + $0x270] sm:$0xff] %v1706
                  %v1708 = vld [vmem:[%s1662 + $0xe0] sm:$0xff]
                  %1709 = vst [vmem:[%s1663 + $0x278] sm:$0xff] %v1708
                  %v1710 = vld [vmem:[%s1662 + $0xe8] sm:$0xff]
                  %1711 = vst [vmem:[%s1663 + $0x280] sm:$0xff] %v1710
                  %v1712 = vld [vmem:[%s1662 + $0x100] sm:$0xff]
                  %1713 = vst [vmem:[%s1663 + $0x320] sm:$0xff] %v1712
                  %v1714 = vld [vmem:[%s1662 + $0x108] sm:$0xff]
                  %1715 = vst [vmem:[%s1663 + $0x328] sm:$0xff] %v1714
                  %v1716 = vld [vmem:[%s1662 + $0x110] sm:$0xff]
                  %1717 = vst [vmem:[%s1663 + $0x330] sm:$0xff] %v1716
                  %v1718 = vld [vmem:[%s1662 + $0x118] sm:$0xff]
                  %1719 = vst [vmem:[%s1663 + $0x338] sm:$0xff] %v1718
                  %v1720 = vld [vmem:[%s1662 + $0x120] sm:$0xff]
                  %1721 = vst [vmem:[%s1663 + $0x340] sm:$0xff] %v1720
                  %v1722 = vld [vmem:[%s1662 + $0x128] sm:$0xff]
                  %1723 = vst [vmem:[%s1663 + $0x348] sm:$0xff] %v1722
                  %v1724 = vld [vmem:[%s1662 + $0x140] sm:$0xff]
                  %1725 = vst [vmem:[%s1663 + $0x3e8] sm:$0xff] %v1724
                  %v1726 = vld [vmem:[%s1662 + $0x148] sm:$0xff]
                  %1727 = vst [vmem:[%s1663 + $0x3f0] sm:$0xff] %v1726
                  %v1728 = vld [vmem:[%s1662 + $0x150] sm:$0xff]
                  %1729 = vst [vmem:[%s1663 + $0x3f8] sm:$0xff] %v1728
                  %v1730 = vld [vmem:[%s1662 + $0x158] sm:$0xff]
                  %1731 = vst [vmem:[%s1663 + $0x400] sm:$0xff] %v1730
                  %v1732 = vld [vmem:[%s1662 + $0x160] sm:$0xff]
                  %1733 = vst [vmem:[%s1663 + $0x408] sm:$0xff] %v1732
                  %v1734 = vld [vmem:[%s1662 + $0x168] sm:$0xff]
                  %1735 = vst [vmem:[%s1663 + $0x410] sm:$0xff] %v1734
                  %s1736 = sadd.s32 1, %s1661
                  %p1737 = scmp.ge.s32.totalorder %s1736, %s1653
                  %s1738 = scalar_select %p1737, 0, %s1736
                  %s1739 = smul.u32 %s1738, 48
                  %s1740 = smul.u32 %s1738, 48
                  %s1741 = scalar_lea.vmem %s1600, %s1739 [#allocation3]
                  %s1742 = scalar_lea.vmem %s1613, %s1740
                $region130: #{se_mul_conv1x1.1} parent=124 // loop_footer
                  %s1658 = sadd.s32 %s1656, 1
                $region131: #{se_mul_conv1x1.1} parent=124 // loop_footer_branch
                  %1655 = sbr.rel target = $region127
                $region132: #{se_mul_conv1x1.1} parent=124 // loop_exit
                  _
                %s1743 = sdiv.u32.pop %s1652, 6
                %s1744 = srem.u32.pop %s1652, 6
                %s1745 = smul.u32 %s1743, 6
                %s1746 = smul.u32 8, %s1745
                %s1747 = scalar_lea.vmem %s1600, %s1746 [#allocation3]
                %s1748 = smul.u32 8, %s1745
                %s1749 = scalar_lea.vmem %s1613, %s1748
                // While loop
                $region133: #{se_mul_conv1x1.1} parent=124 // loop_pre_header
                  _
                $region134: #{se_mul_conv1x1.1} parent=124 // loop_header
                  %s1751 = sphi 0, %s1753
                  %p1752 = scmp.ge.s32.totalorder %s1751, %s1744
                  %s1756 = sphi 0, %s1773
                  %s1757 = sphi %s1747, %s1776
                  %s1758 = sphi %s1749, %s1777
                $region135: #{se_mul_conv1x1.1} parent=124 // loop_header_branch
                  %1755 = sbr.rel (%p1752) target = $region139
                $region136: #{se_mul_conv1x1.1} parent=124 // loop_body
                  %v1759 = vld [vmem:[%s1757] sm:$0xff]
                  %1760 = vst [vmem:[%s1758] sm:$0xff] %v1759
                  %v1761 = vld [vmem:[%s1757 + $0x40] sm:$0xff]
                  %1762 = vst [vmem:[%s1758 + $0xc8] sm:$0xff] %v1761
                  %v1763 = vld [vmem:[%s1757 + $0x80] sm:$0xff]
                  %1764 = vst [vmem:[%s1758 + $0x190] sm:$0xff] %v1763
                  %v1765 = vld [vmem:[%s1757 + $0xc0] sm:$0xff]
                  %1766 = vst [vmem:[%s1758 + $0x258] sm:$0xff] %v1765
                  %v1767 = vld [vmem:[%s1757 + $0x100] sm:$0xff]
                  %1768 = vst [vmem:[%s1758 + $0x320] sm:$0xff] %v1767
                  %v1769 = vld [vmem:[%s1757 + $0x140] sm:$0xff]
                  %1770 = vst [vmem:[%s1758 + $0x3e8] sm:$0xff] %v1769
                  %s1771 = sadd.s32 1, %s1756
                  %p1772 = scmp.ge.s32.totalorder %s1771, %s1744
                  %s1773 = scalar_select %p1772, 0, %s1771
                  %s1774 = smul.u32 %s1773, 8
                  %s1775 = smul.u32 %s1773, 8
                  %s1776 = scalar_lea.vmem %s1747, %s1774 [#allocation3]
                  %s1777 = scalar_lea.vmem %s1749, %s1775
                $region137: #{se_mul_conv1x1.1} parent=124 // loop_footer
                  %s1753 = sadd.s32 %s1751, 1
                $region138: #{se_mul_conv1x1.1} parent=124 // loop_footer_branch
                  %1750 = sbr.rel target = $region134
                $region139: #{se_mul_conv1x1.1} parent=124 // loop_exit
                  _
              $region125: #{se_mul_conv1x1.1} parent=109 // pred_fallthru
                _
              %p1778 = pneg %p1648
              // Predicated region
              $region140: #{se_mul_conv1x1.1} parent=109 // pred_check
                _
              $region141: #{se_mul_conv1x1.1} parent=109 // pred_check_branch
                %1780 = sbr.rel (%p1648) target = $region143
              $region142: #{se_mul_conv1x1.1} parent=109 // pred_region
                %s1781 = sand.u32 %s1614, 7
                %s1782 = ssub.s32 %s1614, %s1781
                %s1783 = scalar_lea.vmem %s1600, %s1782 [#allocation3]
                %s1784 = ssub.s32 %s1614, %s1781
                %s1785 = scalar_lea.vmem %s1613, %s1784
                %s1786 = sshrl.u32 %s1614, 3
                %s1787 = sdiv.u32.pop %s1786, 6
                %s1788 = srem.u32.pop %s1786, 6
                // While loop
                $region144: #{se_mul_conv1x1.1} parent=142 // loop_pre_header
                  _
                $region145: #{se_mul_conv1x1.1} parent=142 // loop_header
                  %s1790 = sphi 0, %s1792
                  %p1791 = scmp.ge.s32.totalorder %s1790, %s1787
                  %s1795 = sphi 0, %s1872
                  %s1796 = sphi %s1600, %s1875
                  %s1797 = sphi %s1613, %s1876
                $region146: #{se_mul_conv1x1.1} parent=142 // loop_header_branch
                  %1794 = sbr.rel (%p1791) target = $region150
                $region147: #{se_mul_conv1x1.1} parent=142 // loop_body
                  %v1798 = vld [vmem:[%s1796] sm:$0xff]
                  %1799 = vst [vmem:[%s1797] sm:$0xff] %v1798
                  %v1800 = vld [vmem:[%s1796 + $0x8] sm:$0xff]
                  %1801 = vst [vmem:[%s1797 + $0x8] sm:$0xff] %v1800
                  %v1802 = vld [vmem:[%s1796 + $0x10] sm:$0xff]
                  %1803 = vst [vmem:[%s1797 + $0x10] sm:$0xff] %v1802
                  %v1804 = vld [vmem:[%s1796 + $0x18] sm:$0xff]
                  %1805 = vst [vmem:[%s1797 + $0x18] sm:$0xff] %v1804
                  %v1806 = vld [vmem:[%s1796 + $0x20] sm:$0xff]
                  %1807 = vst [vmem:[%s1797 + $0x20] sm:$0xff] %v1806
                  %v1808 = vld [vmem:[%s1796 + $0x28] sm:$0xff]
                  %1809 = vst [vmem:[%s1797 + $0x28] sm:$0xff] %v1808
                  %v1810 = vld [vmem:[%s1796 + $0x40] sm:$0xff]
                  %1811 = vst [vmem:[%s1797 + $0xc8] sm:$0xff] %v1810
                  %v1812 = vld [vmem:[%s1796 + $0x48] sm:$0xff]
                  %1813 = vst [vmem:[%s1797 + $0xd0] sm:$0xff] %v1812
                  %v1814 = vld [vmem:[%s1796 + $0x50] sm:$0xff]
                  %1815 = vst [vmem:[%s1797 + $0xd8] sm:$0xff] %v1814
                  %v1816 = vld [vmem:[%s1796 + $0x58] sm:$0xff]
                  %1817 = vst [vmem:[%s1797 + $0xe0] sm:$0xff] %v1816
                  %v1818 = vld [vmem:[%s1796 + $0x60] sm:$0xff]
                  %1819 = vst [vmem:[%s1797 + $0xe8] sm:$0xff] %v1818
                  %v1820 = vld [vmem:[%s1796 + $0x68] sm:$0xff]
                  %1821 = vst [vmem:[%s1797 + $0xf0] sm:$0xff] %v1820
                  %v1822 = vld [vmem:[%s1796 + $0x80] sm:$0xff]
                  %1823 = vst [vmem:[%s1797 + $0x190] sm:$0xff] %v1822
                  %v1824 = vld [vmem:[%s1796 + $0x88] sm:$0xff]
                  %1825 = vst [vmem:[%s1797 + $0x198] sm:$0xff] %v1824
                  %v1826 = vld [vmem:[%s1796 + $0x90] sm:$0xff]
                  %1827 = vst [vmem:[%s1797 + $0x1a0] sm:$0xff] %v1826
                  %v1828 = vld [vmem:[%s1796 + $0x98] sm:$0xff]
                  %1829 = vst [vmem:[%s1797 + $0x1a8] sm:$0xff] %v1828
                  %v1830 = vld [vmem:[%s1796 + $0xa0] sm:$0xff]
                  %1831 = vst [vmem:[%s1797 + $0x1b0] sm:$0xff] %v1830
                  %v1832 = vld [vmem:[%s1796 + $0xa8] sm:$0xff]
                  %1833 = vst [vmem:[%s1797 + $0x1b8] sm:$0xff] %v1832
                  %v1834 = vld [vmem:[%s1796 + $0xc0] sm:$0xff]
                  %1835 = vst [vmem:[%s1797 + $0x258] sm:$0xff] %v1834
                  %v1836 = vld [vmem:[%s1796 + $0xc8] sm:$0xff]
                  %1837 = vst [vmem:[%s1797 + $0x260] sm:$0xff] %v1836
                  %v1838 = vld [vmem:[%s1796 + $0xd0] sm:$0xff]
                  %1839 = vst [vmem:[%s1797 + $0x268] sm:$0xff] %v1838
                  %v1840 = vld [vmem:[%s1796 + $0xd8] sm:$0xff]
                  %1841 = vst [vmem:[%s1797 + $0x270] sm:$0xff] %v1840
                  %v1842 = vld [vmem:[%s1796 + $0xe0] sm:$0xff]
                  %1843 = vst [vmem:[%s1797 + $0x278] sm:$0xff] %v1842
                  %v1844 = vld [vmem:[%s1796 + $0xe8] sm:$0xff]
                  %1845 = vst [vmem:[%s1797 + $0x280] sm:$0xff] %v1844
                  %v1846 = vld [vmem:[%s1796 + $0x100] sm:$0xff]
                  %1847 = vst [vmem:[%s1797 + $0x320] sm:$0xff] %v1846
                  %v1848 = vld [vmem:[%s1796 + $0x108] sm:$0xff]
                  %1849 = vst [vmem:[%s1797 + $0x328] sm:$0xff] %v1848
                  %v1850 = vld [vmem:[%s1796 + $0x110] sm:$0xff]
                  %1851 = vst [vmem:[%s1797 + $0x330] sm:$0xff] %v1850
                  %v1852 = vld [vmem:[%s1796 + $0x118] sm:$0xff]
                  %1853 = vst [vmem:[%s1797 + $0x338] sm:$0xff] %v1852
                  %v1854 = vld [vmem:[%s1796 + $0x120] sm:$0xff]
                  %1855 = vst [vmem:[%s1797 + $0x340] sm:$0xff] %v1854
                  %v1856 = vld [vmem:[%s1796 + $0x128] sm:$0xff]
                  %1857 = vst [vmem:[%s1797 + $0x348] sm:$0xff] %v1856
                  %v1858 = vld [vmem:[%s1796 + $0x140] sm:$0xff]
                  %1859 = vst [vmem:[%s1797 + $0x3e8] sm:$0xff] %v1858
                  %v1860 = vld [vmem:[%s1796 + $0x148] sm:$0xff]
                  %1861 = vst [vmem:[%s1797 + $0x3f0] sm:$0xff] %v1860
                  %v1862 = vld [vmem:[%s1796 + $0x150] sm:$0xff]
                  %1863 = vst [vmem:[%s1797 + $0x3f8] sm:$0xff] %v1862
                  %v1864 = vld [vmem:[%s1796 + $0x158] sm:$0xff]
                  %1865 = vst [vmem:[%s1797 + $0x400] sm:$0xff] %v1864
                  %v1866 = vld [vmem:[%s1796 + $0x160] sm:$0xff]
                  %1867 = vst [vmem:[%s1797 + $0x408] sm:$0xff] %v1866
                  %v1868 = vld [vmem:[%s1796 + $0x168] sm:$0xff]
                  %1869 = vst [vmem:[%s1797 + $0x410] sm:$0xff] %v1868
                  %s1870 = sadd.s32 1, %s1795
                  %p1871 = scmp.ge.s32.totalorder %s1870, %s1787
                  %s1872 = scalar_select %p1871, 0, %s1870
                  %s1873 = smul.u32 %s1872, 48
                  %s1874 = smul.u32 %s1872, 48
                  %s1875 = scalar_lea.vmem %s1600, %s1873 [#allocation3]
                  %s1876 = scalar_lea.vmem %s1613, %s1874
                $region148: #{se_mul_conv1x1.1} parent=142 // loop_footer
                  %s1792 = sadd.s32 %s1790, 1
                $region149: #{se_mul_conv1x1.1} parent=142 // loop_footer_branch
                  %1789 = sbr.rel target = $region145
                $region150: #{se_mul_conv1x1.1} parent=142 // loop_exit
                  _
                %s1877 = sdiv.u32.pop %s1786, 6
                %s1878 = srem.u32.pop %s1786, 6
                %s1879 = smul.u32 %s1877, 6
                %s1880 = smul.u32 8, %s1879
                %s1881 = scalar_lea.vmem %s1600, %s1880 [#allocation3]
                %s1882 = smul.u32 8, %s1879
                %s1883 = scalar_lea.vmem %s1613, %s1882
                // While loop
                $region151: #{se_mul_conv1x1.1} parent=142 // loop_pre_header
                  _
                $region152: #{se_mul_conv1x1.1} parent=142 // loop_header
                  %s1885 = sphi 0, %s1887
                  %p1886 = scmp.ge.s32.totalorder %s1885, %s1878
                  %s1890 = sphi 0, %s1907
                  %s1891 = sphi %s1881, %s1910
                  %s1892 = sphi %s1883, %s1911
                $region153: #{se_mul_conv1x1.1} parent=142 // loop_header_branch
                  %1889 = sbr.rel (%p1886) target = $region157
                $region154: #{se_mul_conv1x1.1} parent=142 // loop_body
                  %v1893 = vld [vmem:[%s1891] sm:$0xff]
                  %1894 = vst [vmem:[%s1892] sm:$0xff] %v1893
                  %v1895 = vld [vmem:[%s1891 + $0x40] sm:$0xff]
                  %1896 = vst [vmem:[%s1892 + $0xc8] sm:$0xff] %v1895
                  %v1897 = vld [vmem:[%s1891 + $0x80] sm:$0xff]
                  %1898 = vst [vmem:[%s1892 + $0x190] sm:$0xff] %v1897
                  %v1899 = vld [vmem:[%s1891 + $0xc0] sm:$0xff]
                  %1900 = vst [vmem:[%s1892 + $0x258] sm:$0xff] %v1899
                  %v1901 = vld [vmem:[%s1891 + $0x100] sm:$0xff]
                  %1902 = vst [vmem:[%s1892 + $0x320] sm:$0xff] %v1901
                  %v1903 = vld [vmem:[%s1891 + $0x140] sm:$0xff]
                  %1904 = vst [vmem:[%s1892 + $0x3e8] sm:$0xff] %v1903
                  %s1905 = sadd.s32 1, %s1890
                  %p1906 = scmp.ge.s32.totalorder %s1905, %s1878
                  %s1907 = scalar_select %p1906, 0, %s1905
                  %s1908 = smul.u32 %s1907, 8
                  %s1909 = smul.u32 %s1907, 8
                  %s1910 = scalar_lea.vmem %s1881, %s1908 [#allocation3]
                  %s1911 = scalar_lea.vmem %s1883, %s1909
                $region155: #{se_mul_conv1x1.1} parent=142 // loop_footer
                  %s1887 = sadd.s32 %s1885, 1
                $region156: #{se_mul_conv1x1.1} parent=142 // loop_footer_branch
                  %1884 = sbr.rel target = $region152
                $region157: #{se_mul_conv1x1.1} parent=142 // loop_exit
                  _
                %s1912 = sshll.u32 1, %s1781
                %s1913 = ssub.s32 %s1912, 1
                loop: start=0, step=1, limit=1
                $region158: #{se_mul_conv1x1.1} parent=142 // loop_pre_header
                  _
                $region159: #{se_mul_conv1x1.1} parent=142 // loop_header
                  %s1915 = sphi 0, %s1919
                  %p1916 = scmp.ge.s32.totalorder %s1915, 1
                  %s1920 = sphi %s1783, %s1783
                  %s1921 = sphi %s1785, %s1785
                $region160: #{se_mul_conv1x1.1} parent=142 // loop_header_branch
                  %1918 = sbr.rel (%p1916) target = $region164
                $region161: #{se_mul_conv1x1.1} parent=142 // loop_body
                  %v1922 = vld [vmem:[%s1920] sm:%s1913]
                  %1923 = vst [vmem:[%s1921] sm:%s1913] %v1922
                  %v1924 = vld [vmem:[%s1920 + $0x40] sm:%s1913]
                  %1925 = vst [vmem:[%s1921 + $0xc8] sm:%s1913] %v1924
                  %v1926 = vld [vmem:[%s1920 + $0x80] sm:%s1913]
                  %1927 = vst [vmem:[%s1921 + $0x190] sm:%s1913] %v1926
                  %v1928 = vld [vmem:[%s1920 + $0xc0] sm:%s1913]
                  %1929 = vst [vmem:[%s1921 + $0x258] sm:%s1913] %v1928
                  %v1930 = vld [vmem:[%s1920 + $0x100] sm:%s1913]
                  %1931 = vst [vmem:[%s1921 + $0x320] sm:%s1913] %v1930
                  %v1932 = vld [vmem:[%s1920 + $0x140] sm:%s1913]
                  %1933 = vst [vmem:[%s1921 + $0x3e8] sm:%s1913] %v1932
                $region162: #{se_mul_conv1x1.1} parent=142 // loop_footer
                  %s1919 = sadd.s32 1, %s1915
                $region163: #{se_mul_conv1x1.1} parent=142 // loop_footer_branch
                  %1914 = sbr.rel target = $region159
                $region164: #{se_mul_conv1x1.1} parent=142 // loop_exit
                  _
              $region143: #{se_mul_conv1x1.1} parent=109 // pred_fallthru
                _
            $region110: #{se_mul_conv1x1.1} parent=105 // pred_fallthru
              _
            // Predicated region
            $region111: #{se_mul_conv1x1.1} parent=105 // pred_check
              %p1622 = pneg %p1618
            $region112: #{se_mul_conv1x1.1} parent=105 // pred_check_branch
              %1624 = sbr.rel (%p1622) target = $region114
            $region113: #{se_mul_conv1x1.1} parent=105 // pred_region
              %s1625 = sshll.u32 1, %s1614
              %s1626 = ssub.s32 %s1625, 1
              loop: start=0, step=1, limit=1
              $region115: #{se_mul_conv1x1.1} parent=113 // loop_pre_header
                _
              $region116: #{se_mul_conv1x1.1} parent=113 // loop_header
                %s1628 = sphi 0, %s1632
                %p1629 = scmp.ge.s32.totalorder %s1628, 1
                %s1633 = sphi %s1600, %s1600
                %s1634 = sphi %s1613, %s1613
              $region117: #{se_mul_conv1x1.1} parent=113 // loop_header_branch
                %1631 = sbr.rel (%p1629) target = $region121
              $region118: #{se_mul_conv1x1.1} parent=113 // loop_body
                %v1635 = vld [vmem:[%s1633] sm:%s1626]
                %1636 = vst [vmem:[%s1634] sm:%s1626] %v1635
                %v1637 = vld [vmem:[%s1633 + $0x40] sm:%s1626]
                %1638 = vst [vmem:[%s1634 + $0xc8] sm:%s1626] %v1637
                %v1639 = vld [vmem:[%s1633 + $0x80] sm:%s1626]
                %1640 = vst [vmem:[%s1634 + $0x190] sm:%s1626] %v1639
                %v1641 = vld [vmem:[%s1633 + $0xc0] sm:%s1626]
                %1642 = vst [vmem:[%s1634 + $0x258] sm:%s1626] %v1641
                %v1643 = vld [vmem:[%s1633 + $0x100] sm:%s1626]
                %1644 = vst [vmem:[%s1634 + $0x320] sm:%s1626] %v1643
                %v1645 = vld [vmem:[%s1633 + $0x140] sm:%s1626]
                %1646 = vst [vmem:[%s1634 + $0x3e8] sm:%s1626] %v1645
              $region119: #{se_mul_conv1x1.1} parent=113 // loop_footer
                %s1632 = sadd.s32 1, %s1628
              $region120: #{se_mul_conv1x1.1} parent=113 // loop_footer_branch
                %1627 = sbr.rel target = $region116
              $region121: #{se_mul_conv1x1.1} parent=113 // loop_exit
                _
            $region114: #{se_mul_conv1x1.1} parent=105 // pred_fallthru
              _
          $region106: #{se_mul_conv1x1.1} parent=101 // pred_fallthru
            _
          %1934 = vnop
        $region102: #{se_mul_conv1x1.1} parent=93 // pred_fallthru
          _
      $region94: #{se_mul_conv1x1.1} parent=5 // pred_fallthru
        _
      %p1935 = scmp.le.s32.totalorder 2, %s9
      // Predicated region
      $region165: #{se_mul_conv1x1.1} parent=5 // pred_check
        %p1936 = pneg %p1935
      $region166: #{se_mul_conv1x1.1} parent=5 // pred_check_branch
        %1938 = sbr.rel (%p1936) target = $region168
      $region167: #{se_mul_conv1x1.1} parent=5 // pred_region
        %s1939 = ssub.s32 %s9, 2
        // Predicated region
        $region169: #{se_mul_conv1x1.1} parent=167 // pred_check
          %p1940 = pneg %p127
        $region170: #{se_mul_conv1x1.1} parent=167 // pred_check_branch
          %1942 = sbr.rel (%p1940) target = $region172
        $region171: #{se_mul_conv1x1.1} parent=167 // pred_region
          %s1943 = sand.u32 %s112, 1
          %s1944 = sand.u32 %s112, 1
          %s1945 = smul.addr %s1944, 384
          %s1946 = scalar_lea.vmem [#allocation3], %s1945
        $region172: #{se_mul_conv1x1.1} parent=167 // pred_fallthru
          _
      $region168: #{se_mul_conv1x1.1} parent=5 // pred_fallthru
        _
    $region6: #{se_mul_conv1x1.1} parent=1 // loop_footer
      %s13 = sadd.s32 1, %s9
    $region7: #{se_mul_conv1x1.1} parent=1 // loop_footer_branch
      %8 = sbr.rel target = $region3
    $region8: #{se_mul_conv1x1.1} parent=1 // loop_exit
      _

</llo_original>
